<compile_context>
chip_gen: v7x
topology: tpu7x:2x2x1
jax: 0.10.0
libtpu: 0.0.40
codegen_flags: <defaults>
</compile_context>

<pallas_src>
import jax
import jax.numpy as jnp
from jax.experimental import pallas as pl
from jax.experimental.pallas import tpu as pltpu

OUT_CH = 96                      # fixed out_channels of every StackCNN
CPAD = 128                       # lane-aligned padded channel count inside the kernel
VMEM_LIMIT_BYTES = 50 * 1024 * 1024
_VMEM_BUDGET = 34 * 1024 * 1024  # per-step working-set target (leave headroom)


def _choose_tb(batch, seq_len, emb_dim, block_num):
    """Largest TB (multiple of 8) whose estimated VMEM working set fits the budget."""
    nb = block_num * CPAD
    b_ceil = ((batch + 7) // 8) * 8

    def est(t):
        x_blk = 2 * seq_len * t * emb_dim * 2                       # 2x-buffered bf16 input
        first = seq_len * t * (2 * emb_dim * 2 + nb * 4 + nb * 2)   # taps + y1 f32 + y1 bf16
        deep = seq_len * t * (nb * 2 + CPAD * 2 + 3 * CPAD * 2 + CPAD * 4)
        return x_blk + max(first, deep) + (4 << 20)                 # weights + slack

    tb = 8
    for cand in (256, 192, 128, 96, 64, 48, 32, 24, 16, 8):
        if cand <= b_ceil and est(cand) <= _VMEM_BUDGET:
            tb = cand
            break
    if tb == 8 or b_ceil >= 2 * tb:
        return tb
    # keep >= 2 grid steps so the "parallel" batch axis can shard across both TCs (v7x)
    half = max(8, ((b_ceil // 2) // 8) * 8)
    return min(tb, half)


def _build_kernel(block_num, has_rest):
    """Kernel closure over the static block structure."""

    def kernel(*refs):
        it = iter(refs)
        x_ref = next(it)                               # (L, TB, E)            bf16
        wf_ref = next(it)                              # (3, E, block_num*128) bf16
        wr_ref = next(it) if has_rest else None        # (n_rest, 384, 128)    bf16
        bf_ref = next(it)                              # (1, block_num*128)    f32
        br_ref = next(it) if has_rest else None        # (n_rest, 1, 128)      f32
        lw_ref = next(it)                              # (block_num, 128, 128) bf16
        lb_ref = next(it)                              # (1, 128)              f32
        o_ref = next(it)                               # (TB, 128)             f32

        seq_len, tb, emb_dim = x_ref.shape
        nb = block_num * CPAD
        l1 = seq_len - 2

        x = x_ref[...]                                 # (L, TB, E) bf16
        # Fused first conv layer of every block: 3 tap matmuls, M=l1*TB, K=E, N=nb.
        y1 = jnp.dot(x[0:l1].reshape(l1 * tb, emb_dim), wf_ref[0],
                     preferred_element_type=jnp.float32)
        y1 = y1 + jnp.dot(x[1:l1 + 1].reshape(l1 * tb, emb_dim), wf_ref[1],
                          preferred_element_type=jnp.float32)
        y1 = y1 + jnp.dot(x[2:l1 + 2].reshape(l1 * tb, emb_dim), wf_ref[2],
                          preferred_element_type=jnp.float32)
        y1 = jnp.maximum(y1 + bf_ref[...], 0.0)        # bias + ReLU in f32
        y1 = y1.reshape(l1, tb, nb).astype(jnp.bfloat16)

        acc = jnp.zeros((tb, CPAD), jnp.float32)
        ri = 0                                         # index into deeper conv stacks
        for blk in range(block_num):
            cur = y1[:, :, blk * CPAD:(blk + 1) * CPAD]          # (l1, TB, 128) bf16
            ln = l1
            for _ in range(blk):                                  # deeper conv layers
                lo = ln - 2
                # im2col as a lane-tile-aligned concat of three leading-axis slices.
                col = jnp.concatenate(
                    [cur[0:lo], cur[1:lo + 1], cur[2:lo + 2]], axis=-1)   # (lo, TB, 384)
                y = jnp.dot(col.reshape(lo * tb, 3 * CPAD), wr_ref[ri],
                            preferred_element_type=jnp.float32)
                y = jnp.maximum(y + br_ref[ri], 0.0)              # bias + ReLU in f32
                ri += 1
                cur = y.reshape(lo, tb, CPAD).astype(jnp.bfloat16)
                ln = lo
            feat = jnp.max(cur, axis=0)                           # AdaptiveMaxPool1d(1)
            acc = acc + jnp.dot(feat, lw_ref[blk],
                                preferred_element_type=jnp.float32)
        o_ref[...] = acc + lb_ref[...]                            # Linear bias (dropout=id)

    return kernel


def _pack_params(params, block_num, emb_dim):
    """Pack conv/linear params into lane-padded, consolidated bf16/f32 arrays."""
    nb = block_num * CPAD
    pad_c = CPAD - OUT_CH
    conv_w = params["conv_w"]          # list of (3, Cin, 96)
    conv_b = params["conv_b"]          # list of (1, 96)

    wf = jnp.zeros((3, emb_dim, nb), jnp.float32)       # fused first-layer weights
    bf = jnp.zeros((1, nb), jnp.float32)                # fused first-layer biases
    w_rest, b_rest = [], []
    li = 0
    for blk in range(block_num):
        for layer in range(blk + 1):
            w = conv_w[li]             # (3, Cin, 96)
            b = conv_b[li][0]          # (96,)
            li += 1
            if layer == 0:
                wf = wf.at[:, :, blk * CPAD:blk * CPAD + OUT_CH].set(w)
                bf = bf.at[0, blk * CPAD:blk * CPAD + OUT_CH].set(b)
            else:
                wp = jnp.pad(w, ((0, 0), (0, pad_c), (0, pad_c)))       # (3,128,128)
                w_rest.append(wp.reshape(3 * CPAD, CPAD))               # im2col layout
                b_rest.append(jnp.pad(b, (0, pad_c)).reshape(1, CPAD))
    wr = jnp.stack(w_rest).astype(jnp.bfloat16) if w_rest else None     # (n_rest,384,128)
    br = jnp.stack(b_rest) if b_rest else None                          # (n_rest,1,128) f32

    lw = params["lin_w"].reshape(block_num, OUT_CH, OUT_CH)
    lw = jnp.pad(lw, ((0, 0), (0, pad_c), (0, pad_c))).astype(jnp.bfloat16)
    lb = jnp.pad(params["lin_b"], ((0, 0), (0, pad_c)))                 # (1,128) f32
    return wf.astype(jnp.bfloat16), wr, bf, br, lw, lb


def target_representation_forward(tokens, params, block_num, tb=None):
    # Embedding lookup is glue (pure gather) done in plain JAX; cast to bf16 for the MXU.
    emb = params["embed"][tokens]                                       # (B, L, E) f32
    batch, seq_len, emb_dim = emb.shape
    assert seq_len > 2 * block_num, "sequence too short for the deepest conv stack"

    x = jnp.transpose(emb, (1, 0, 2)).astype(jnp.bfloat16)              # (L, B, E)

    if tb is None:
        tb = _choose_tb(batch, seq_len, emb_dim, block_num)
    tb = max(8, (int(tb) // 8) * 8)
    b_pad = ((batch + tb - 1) // tb) * tb
    if b_pad != batch:
        x = jnp.pad(x, ((0, 0), (0, b_pad - batch), (0, 0)))

    wf, wr, bf, br, lw, lb = _pack_params(params, block_num, emb_dim)
    has_rest = wr is not None
    kernel = _build_kernel(block_num, has_rest)

    in_specs = [pl.BlockSpec((seq_len, tb, emb_dim), lambda b: (0, b, 0)),
                pl.BlockSpec(wf.shape, lambda b: (0, 0, 0))]
    args = [x, wf]
    if has_rest:
        in_specs.append(pl.BlockSpec(wr.shape, lambda b: (0, 0, 0)))
        args.append(wr)
    in_specs.append(pl.BlockSpec(bf.shape, lambda b: (0, 0)))
    args.append(bf)
    if has_rest:
        in_specs.append(pl.BlockSpec(br.shape, lambda b: (0, 0, 0)))
        args.append(br)
    in_specs += [pl.BlockSpec(lw.shape, lambda b: (0, 0, 0)),
                 pl.BlockSpec(lb.shape, lambda b: (0, 0))]
    args += [lw, lb]

    out = pl.pallas_call(
        kernel,
        out_shape=jax.ShapeDtypeStruct((b_pad, CPAD), jnp.float32),
        grid=(b_pad // tb,),
        in_specs=in_specs,
        out_specs=pl.BlockSpec((tb, CPAD), lambda b: (b, 0)),
        compiler_params=pltpu.CompilerParams(
            dimension_semantics=("parallel",),
            vmem_limit_bytes=VMEM_LIMIT_BYTES),
    )(*args)
    return out[:batch, :OUT_CH]                                         # (B, 96)


def init_params(key, block_num, vocab_size, embedding_num):
    params = {}
    key, k = jax.random.split(key)
    embed = jax.random.normal(k, (vocab_size, embedding_num), jnp.float32) * 0.1
    embed = embed.at[0].set(0.0)                         # padding_idx=0
    params["embed"] = embed

    conv_w, conv_b = [], []
    for blk in range(block_num):
        for layer in range(blk + 1):
            cin = embedding_num if layer == 0 else OUT_CH
            key, kw, kb = jax.random.split(key, 3)
            bound = 1.0 / float(jnp.sqrt(jnp.float32(cin * 3)))
            # stored as (K, Cin, Cout) == transpose of PyTorch (Cout, Cin, K)
            conv_w.append(jax.random.uniform(kw, (3, cin, OUT_CH),
                                             jnp.float32, -bound, bound))
            conv_b.append(jax.random.uniform(kb, (1, OUT_CH),
                                             jnp.float32, -bound, bound))
    params["conv_w"] = conv_w
    params["conv_b"] = conv_b

    key, kw, kb = jax.random.split(key, 3)
    bound = 1.0 / float(jnp.sqrt(jnp.float32(block_num * OUT_CH)))
    # stored as (in_features, out_features) == PyTorch weight.T
    params["lin_w"] = jax.random.uniform(kw, (block_num * OUT_CH, OUT_CH),
                                         jnp.float32, -bound, bound)
    params["lin_b"] = jax.random.uniform(kb, (1, OUT_CH),
                                         jnp.float32, -bound, bound)
    return params


def reference_forward(tokens, params, block_num):
    """Pure-JAX f32 reference mirroring the PyTorch forward (eval mode)."""
    emb = params["embed"][tokens]                        # (B, L, E)
    feats = []
    li = 0
    for blk in range(block_num):
        cur = emb
        for _ in range(blk + 1):
            w = params["conv_w"][li]
            b = params["conv_b"][li]
            li += 1
            l_out = cur.shape[1] - 2
            y = (jnp.einsum("ble,eo->blo", cur[:, 0:l_out], w[0])
                 + jnp.einsum("ble,eo->blo", cur[:, 1:l_out + 1], w[1])
                 + jnp.einsum("ble,eo->blo", cur[:, 2:l_out + 2], w[2])
                 + b[None])
            cur = jnp.maximum(y, 0.0)
        feats.append(jnp.max(cur, axis=1))               # (B, 96)
    feat = jnp.concatenate(feats, axis=-1)
    return feat @ params["lin_w"] + params["lin_b"]


if __name__ == "__main__":
    block_num = 3
    vocab_size = 25
    embedding_num = 32
    B, L = 2, 16

    key = jax.random.PRNGKey(0)
    kp, kt = jax.random.split(key)
    params = init_params(kp, block_num, vocab_size, embedding_num)
    tokens = jax.random.randint(kt, (B, L), 0, vocab_size, dtype=jnp.int32)

    out = target_representation_forward(tokens, params, block_num)
    out = jax.block_until_ready(out)

    ref = reference_forward(tokens, params, block_num)
    assert out.shape == (B, OUT_CH), out.shape
    # bf16 MXU operands: loosened tolerance vs the f32 reference.
    err = float(jnp.max(jnp.abs(out - ref)))
    assert jnp.allclose(out, ref, atol=3e-2, rtol=3e-2), err
    print("KERNEL_OK")
</pallas_src>

<mosaic_0001>
module attributes {stable_mosaic.version = 11 : i64} {
  func.func @kernel(%arg0: i32, %arg1: memref<16x8x32xbf16, #tpu.memory_space<vmem>>, %arg2: memref<3x32x384xbf16, #tpu.memory_space<vmem>>, %arg3: memref<3x384x128xbf16, #tpu.memory_space<vmem>>, %arg4: memref<1x384xf32, #tpu.memory_space<vmem>>, %arg5: memref<3x1x128xf32, #tpu.memory_space<vmem>>, %arg6: memref<3x128x128xbf16, #tpu.memory_space<vmem>>, %arg7: memref<1x128xf32, #tpu.memory_space<vmem>>, %arg8: memref<8x128xf32, #tpu.memory_space<vmem>>) attributes {dimension_semantics = [#tpu.dimension_semantics<parallel>], iteration_bounds = array<i64: 1>, scalar_prefetch = 0 : i64, scratch_operands = 0 : i64, tpu.core_type = #tpu.core_type<tc>, window_params = [{transform_indices = @transform_0, window_bounds = array<i64: 16, 8, 32>}, {pipeline_mode = #tpu.pipeline_mode<synchronous>, transform_indices = @transform_1, window_bounds = array<i64: 3, 32, 384>}, {pipeline_mode = #tpu.pipeline_mode<synchronous>, transform_indices = @transform_2, window_bounds = array<i64: 3, 384, 128>}, {pipeline_mode = #tpu.pipeline_mode<synchronous>, transform_indices = @transform_3, window_bounds = array<i64: 1, 384>}, {pipeline_mode = #tpu.pipeline_mode<synchronous>, transform_indices = @transform_4, window_bounds = array<i64: 3, 1, 128>}, {pipeline_mode = #tpu.pipeline_mode<synchronous>, transform_indices = @transform_5, window_bounds = array<i64: 3, 128, 128>}, {pipeline_mode = #tpu.pipeline_mode<synchronous>, transform_indices = @transform_6, window_bounds = array<i64: 1, 128>}, {transform_indices = @transform_7, window_bounds = array<i64: 8, 128>}]} {
    %c0 = arith.constant 0 : index
    %c0_0 = arith.constant 0 : index
    %c0_1 = arith.constant 0 : index
    %0 = vector.load %arg1[%c0, %c0_0, %c0_1] : memref<16x8x32xbf16, #tpu.memory_space<vmem>>, vector<16x8x32xbf16>
    %1 = vector.extract_strided_slice %0 {offsets = [0, 0, 0], sizes = [14, 8, 32], strides = [1, 1, 1]} : vector<16x8x32xbf16> to vector<14x8x32xbf16>
    %2 = vector.shape_cast %1 : vector<14x8x32xbf16> to vector<112x32xbf16>
    %c0_2 = arith.constant 0 : index
    %c0_3 = arith.constant 0 : index
    %c0_4 = arith.constant 0 : index
    %3 = vector.load %arg2[%c0_2, %c0_3, %c0_4] : memref<3x32x384xbf16, #tpu.memory_space<vmem>>, vector<1x32x384xbf16>
    %4 = vector.shape_cast %3 : vector<1x32x384xbf16> to vector<32x384xbf16>
    %cst = arith.constant dense<0.000000e+00> : vector<112x384xf32>
    %5 = tpu.matmul %2, %4, %cst {dimension_numbers = #tpu.dot_dimension_numbers<[1], [0], [0], [1], [0, 0, 1, 1], [], []>} : vector<112x32xbf16>, vector<32x384xbf16>, vector<112x384xf32> -> vector<112x384xf32>
    %6 = vector.extract_strided_slice %0 {offsets = [1, 0, 0], sizes = [14, 8, 32], strides = [1, 1, 1]} : vector<16x8x32xbf16> to vector<14x8x32xbf16>
    %7 = vector.shape_cast %6 : vector<14x8x32xbf16> to vector<112x32xbf16>
    %c1 = arith.constant 1 : index
    %c0_5 = arith.constant 0 : index
    %c0_6 = arith.constant 0 : index
    %8 = vector.load %arg2[%c1, %c0_5, %c0_6] : memref<3x32x384xbf16, #tpu.memory_space<vmem>>, vector<1x32x384xbf16>
    %9 = vector.shape_cast %8 : vector<1x32x384xbf16> to vector<32x384xbf16>
    %cst_7 = arith.constant dense<0.000000e+00> : vector<112x384xf32>
    %10 = tpu.matmul %7, %9, %cst_7 {dimension_numbers = #tpu.dot_dimension_numbers<[1], [0], [0], [1], [0, 0, 1, 1], [], []>} : vector<112x32xbf16>, vector<32x384xbf16>, vector<112x384xf32> -> vector<112x384xf32>
    %11 = arith.addf %5, %10 : vector<112x384xf32>
    %12 = vector.extract_strided_slice %0 {offsets = [2, 0, 0], sizes = [14, 8, 32], strides = [1, 1, 1]} : vector<16x8x32xbf16> to vector<14x8x32xbf16>
    %13 = vector.shape_cast %12 : vector<14x8x32xbf16> to vector<112x32xbf16>
    %c2 = arith.constant 2 : index
    %c0_8 = arith.constant 0 : index
    %c0_9 = arith.constant 0 : index
    %14 = vector.load %arg2[%c2, %c0_8, %c0_9] : memref<3x32x384xbf16, #tpu.memory_space<vmem>>, vector<1x32x384xbf16>
    %15 = vector.shape_cast %14 : vector<1x32x384xbf16> to vector<32x384xbf16>
    %cst_10 = arith.constant dense<0.000000e+00> : vector<112x384xf32>
    %16 = tpu.matmul %13, %15, %cst_10 {dimension_numbers = #tpu.dot_dimension_numbers<[1], [0], [0], [1], [0, 0, 1, 1], [], []>} : vector<112x32xbf16>, vector<32x384xbf16>, vector<112x384xf32> -> vector<112x384xf32>
    %17 = arith.addf %11, %16 : vector<112x384xf32>
    %c0_11 = arith.constant 0 : index
    %c0_12 = arith.constant 0 : index
    %18 = vector.load %arg4[%c0_11, %c0_12] : memref<1x384xf32, #tpu.memory_space<vmem>>, vector<1x384xf32>
    %19 = vector.broadcast %18 : vector<1x384xf32> to vector<112x384xf32>
    %20 = arith.addf %17, %19 : vector<112x384xf32>
    %cst_13 = arith.constant 0.000000e+00 : f32
    %21 = vector.broadcast %cst_13 : f32 to vector<112x384xf32>
    %22 = arith.maximumf %20, %21 : vector<112x384xf32>
    %23 = vector.shape_cast %22 : vector<112x384xf32> to vector<14x8x384xf32>
    %24 = arith.truncf %23 : vector<14x8x384xf32> to vector<14x8x384xbf16>
    %cst_14 = arith.constant 0.000000e+00 : f32
    %25 = vector.broadcast %cst_14 : f32 to vector<8x128xf32>
    %26 = vector.extract_strided_slice %24 {offsets = [0, 0, 0], sizes = [14, 8, 128], strides = [1, 1, 1]} : vector<14x8x384xbf16> to vector<14x8x128xbf16>
    %cst_15 = arith.constant dense<0xFF80> : vector<8x128xbf16>
    %27 = vector.multi_reduction <maximumf>, %26, %cst_15 [0] : vector<14x8x128xbf16> to vector<8x128xbf16>
    %c0_16 = arith.constant 0 : index
    %c0_17 = arith.constant 0 : index
    %c0_18 = arith.constant 0 : index
    %28 = vector.load %arg6[%c0_16, %c0_17, %c0_18] : memref<3x128x128xbf16, #tpu.memory_space<vmem>>, vector<1x128x128xbf16>
    %29 = vector.shape_cast %28 : vector<1x128x128xbf16> to vector<128x128xbf16>
    %cst_19 = arith.constant dense<0.000000e+00> : vector<8x128xf32>
    %30 = tpu.matmul %27, %29, %cst_19 {dimension_numbers = #tpu.dot_dimension_numbers<[1], [0], [0], [1], [0, 0, 1, 1], [], []>} : vector<8x128xbf16>, vector<128x128xbf16>, vector<8x128xf32> -> vector<8x128xf32>
    %31 = arith.addf %25, %30 : vector<8x128xf32>
    %32 = vector.extract_strided_slice %24 {offsets = [0, 0, 128], sizes = [14, 8, 128], strides = [1, 1, 1]} : vector<14x8x384xbf16> to vector<14x8x128xbf16>
    %33 = vector.extract_strided_slice %32 {offsets = [0, 0, 0], sizes = [12, 8, 128], strides = [1, 1, 1]} : vector<14x8x128xbf16> to vector<12x8x128xbf16>
    %34 = vector.extract_strided_slice %32 {offsets = [1, 0, 0], sizes = [12, 8, 128], strides = [1, 1, 1]} : vector<14x8x128xbf16> to vector<12x8x128xbf16>
    %35 = vector.extract_strided_slice %32 {offsets = [2, 0, 0], sizes = [12, 8, 128], strides = [1, 1, 1]} : vector<14x8x128xbf16> to vector<12x8x128xbf16>
    %36 = tpu.concatenate %33, %34, %35 in 2 : vector<12x8x128xbf16>, vector<12x8x128xbf16>, vector<12x8x128xbf16> -> vector<12x8x384xbf16>
    %37 = vector.shape_cast %36 : vector<12x8x384xbf16> to vector<96x384xbf16>
    %c0_20 = arith.constant 0 : index
    %c0_21 = arith.constant 0 : index
    %c0_22 = arith.constant 0 : index
    %38 = vector.load %arg3[%c0_20, %c0_21, %c0_22] : memref<3x384x128xbf16, #tpu.memory_space<vmem>>, vector<1x384x128xbf16>
    %39 = vector.shape_cast %38 : vector<1x384x128xbf16> to vector<384x128xbf16>
    %cst_23 = arith.constant dense<0.000000e+00> : vector<96x128xf32>
    %40 = tpu.matmul %37, %39, %cst_23 {dimension_numbers = #tpu.dot_dimension_numbers<[1], [0], [0], [1], [0, 0, 1, 1], [], []>} : vector<96x384xbf16>, vector<384x128xbf16>, vector<96x128xf32> -> vector<96x128xf32>
    %c0_24 = arith.constant 0 : index
    %c0_25 = arith.constant 0 : index
    %c0_26 = arith.constant 0 : index
    %41 = vector.load %arg5[%c0_24, %c0_25, %c0_26] : memref<3x1x128xf32, #tpu.memory_space<vmem>>, vector<1x1x128xf32>
    %42 = vector.shape_cast %41 : vector<1x1x128xf32> to vector<1x128xf32>
    %43 = vector.broadcast %42 : vector<1x128xf32> to vector<96x128xf32>
    %44 = arith.addf %40, %43 : vector<96x128xf32>
    %cst_27 = arith.constant 0.000000e+00 : f32
    %45 = vector.broadcast %cst_27 : f32 to vector<96x128xf32>
    %46 = arith.maximumf %44, %45 : vector<96x128xf32>
    %47 = vector.shape_cast %46 : vector<96x128xf32> to vector<12x8x128xf32>
    %48 = arith.truncf %47 : vector<12x8x128xf32> to vector<12x8x128xbf16>
    %cst_28 = arith.constant dense<0xFF80> : vector<8x128xbf16>
    %49 = vector.multi_reduction <maximumf>, %48, %cst_28 [0] : vector<12x8x128xbf16> to vector<8x128xbf16>
    %c1_29 = arith.constant 1 : index
    %c0_30 = arith.constant 0 : index
    %c0_31 = arith.constant 0 : index
    %50 = vector.load %arg6[%c1_29, %c0_30, %c0_31] : memref<3x128x128xbf16, #tpu.memory_space<vmem>>, vector<1x128x128xbf16>
    %51 = vector.shape_cast %50 : vector<1x128x128xbf16> to vector<128x128xbf16>
    %cst_32 = arith.constant dense<0.000000e+00> : vector<8x128xf32>
    %52 = tpu.matmul %49, %51, %cst_32 {dimension_numbers = #tpu.dot_dimension_numbers<[1], [0], [0], [1], [0, 0, 1, 1], [], []>} : vector<8x128xbf16>, vector<128x128xbf16>, vector<8x128xf32> -> vector<8x128xf32>
    %53 = arith.addf %31, %52 : vector<8x128xf32>
    %54 = vector.extract_strided_slice %24 {offsets = [0, 0, 256], sizes = [14, 8, 128], strides = [1, 1, 1]} : vector<14x8x384xbf16> to vector<14x8x128xbf16>
    %55 = vector.extract_strided_slice %54 {offsets = [0, 0, 0], sizes = [12, 8, 128], strides = [1, 1, 1]} : vector<14x8x128xbf16> to vector<12x8x128xbf16>
    %56 = vector.extract_strided_slice %54 {offsets = [1, 0, 0], sizes = [12, 8, 128], strides = [1, 1, 1]} : vector<14x8x128xbf16> to vector<12x8x128xbf16>
    %57 = vector.extract_strided_slice %54 {offsets = [2, 0, 0], sizes = [12, 8, 128], strides = [1, 1, 1]} : vector<14x8x128xbf16> to vector<12x8x128xbf16>
    %58 = tpu.concatenate %55, %56, %57 in 2 : vector<12x8x128xbf16>, vector<12x8x128xbf16>, vector<12x8x128xbf16> -> vector<12x8x384xbf16>
    %59 = vector.shape_cast %58 : vector<12x8x384xbf16> to vector<96x384xbf16>
    %c1_33 = arith.constant 1 : index
    %c0_34 = arith.constant 0 : index
    %c0_35 = arith.constant 0 : index
    %60 = vector.load %arg3[%c1_33, %c0_34, %c0_35] : memref<3x384x128xbf16, #tpu.memory_space<vmem>>, vector<1x384x128xbf16>
    %61 = vector.shape_cast %60 : vector<1x384x128xbf16> to vector<384x128xbf16>
    %cst_36 = arith.constant dense<0.000000e+00> : vector<96x128xf32>
    %62 = tpu.matmul %59, %61, %cst_36 {dimension_numbers = #tpu.dot_dimension_numbers<[1], [0], [0], [1], [0, 0, 1, 1], [], []>} : vector<96x384xbf16>, vector<384x128xbf16>, vector<96x128xf32> -> vector<96x128xf32>
    %c1_37 = arith.constant 1 : index
    %c0_38 = arith.constant 0 : index
    %c0_39 = arith.constant 0 : index
    %63 = vector.load %arg5[%c1_37, %c0_38, %c0_39] : memref<3x1x128xf32, #tpu.memory_space<vmem>>, vector<1x1x128xf32>
    %64 = vector.shape_cast %63 : vector<1x1x128xf32> to vector<1x128xf32>
    %65 = vector.broadcast %64 : vector<1x128xf32> to vector<96x128xf32>
    %66 = arith.addf %62, %65 : vector<96x128xf32>
    %cst_40 = arith.constant 0.000000e+00 : f32
    %67 = vector.broadcast %cst_40 : f32 to vector<96x128xf32>
    %68 = arith.maximumf %66, %67 : vector<96x128xf32>
    %69 = vector.shape_cast %68 : vector<96x128xf32> to vector<12x8x128xf32>
    %70 = arith.truncf %69 : vector<12x8x128xf32> to vector<12x8x128xbf16>
    %71 = vector.extract_strided_slice %70 {offsets = [0, 0, 0], sizes = [10, 8, 128], strides = [1, 1, 1]} : vector<12x8x128xbf16> to vector<10x8x128xbf16>
    %72 = vector.extract_strided_slice %70 {offsets = [1, 0, 0], sizes = [10, 8, 128], strides = [1, 1, 1]} : vector<12x8x128xbf16> to vector<10x8x128xbf16>
    %73 = vector.extract_strided_slice %70 {offsets = [2, 0, 0], sizes = [10, 8, 128], strides = [1, 1, 1]} : vector<12x8x128xbf16> to vector<10x8x128xbf16>
    %74 = tpu.concatenate %71, %72, %73 in 2 : vector<10x8x128xbf16>, vector<10x8x128xbf16>, vector<10x8x128xbf16> -> vector<10x8x384xbf16>
    %75 = vector.shape_cast %74 : vector<10x8x384xbf16> to vector<80x384xbf16>
    %c2_41 = arith.constant 2 : index
    %c0_42 = arith.constant 0 : index
    %c0_43 = arith.constant 0 : index
    %76 = vector.load %arg3[%c2_41, %c0_42, %c0_43] : memref<3x384x128xbf16, #tpu.memory_space<vmem>>, vector<1x384x128xbf16>
    %77 = vector.shape_cast %76 : vector<1x384x128xbf16> to vector<384x128xbf16>
    %cst_44 = arith.constant dense<0.000000e+00> : vector<80x128xf32>
    %78 = tpu.matmul %75, %77, %cst_44 {dimension_numbers = #tpu.dot_dimension_numbers<[1], [0], [0], [1], [0, 0, 1, 1], [], []>} : vector<80x384xbf16>, vector<384x128xbf16>, vector<80x128xf32> -> vector<80x128xf32>
    %c2_45 = arith.constant 2 : index
    %c0_46 = arith.constant 0 : index
    %c0_47 = arith.constant 0 : index
    %79 = vector.load %arg5[%c2_45, %c0_46, %c0_47] : memref<3x1x128xf32, #tpu.memory_space<vmem>>, vector<1x1x128xf32>
    %80 = vector.shape_cast %79 : vector<1x1x128xf32> to vector<1x128xf32>
    %81 = vector.broadcast %80 : vector<1x128xf32> to vector<80x128xf32>
    %82 = arith.addf %78, %81 : vector<80x128xf32>
    %cst_48 = arith.constant 0.000000e+00 : f32
    %83 = vector.broadcast %cst_48 : f32 to vector<80x128xf32>
    %84 = arith.maximumf %82, %83 : vector<80x128xf32>
    %85 = vector.shape_cast %84 : vector<80x128xf32> to vector<10x8x128xf32>
    %86 = arith.truncf %85 : vector<10x8x128xf32> to vector<10x8x128xbf16>
    %cst_49 = arith.constant dense<0xFF80> : vector<8x128xbf16>
    %87 = vector.multi_reduction <maximumf>, %86, %cst_49 [0] : vector<10x8x128xbf16> to vector<8x128xbf16>
    %c2_50 = arith.constant 2 : index
    %c0_51 = arith.constant 0 : index
    %c0_52 = arith.constant 0 : index
    %88 = vector.load %arg6[%c2_50, %c0_51, %c0_52] : memref<3x128x128xbf16, #tpu.memory_space<vmem>>, vector<1x128x128xbf16>
    %89 = vector.shape_cast %88 : vector<1x128x128xbf16> to vector<128x128xbf16>
    %cst_53 = arith.constant dense<0.000000e+00> : vector<8x128xf32>
    %90 = tpu.matmul %87, %89, %cst_53 {dimension_numbers = #tpu.dot_dimension_numbers<[1], [0], [0], [1], [0, 0, 1, 1], [], []>} : vector<8x128xbf16>, vector<128x128xbf16>, vector<8x128xf32> -> vector<8x128xf32>
    %91 = arith.addf %53, %90 : vector<8x128xf32>
    %c0_54 = arith.constant 0 : index
    %c0_55 = arith.constant 0 : index
    %92 = vector.load %arg7[%c0_54, %c0_55] : memref<1x128xf32, #tpu.memory_space<vmem>>, vector<1x128xf32>
    %93 = vector.broadcast %92 : vector<1x128xf32> to vector<8x128xf32>
    %94 = arith.addf %91, %93 : vector<8x128xf32>
    %c0_56 = arith.constant 0 : index
    %c0_57 = arith.constant 0 : index
    %95 = vector.load %arg8[%c0_56, %c0_57] : memref<8x128xf32, #tpu.memory_space<vmem>>, vector<8x128xf32>
    tpu.vector_store %arg8[%c0_56, %c0_57], %94 {strides = array<i32>} : memref<8x128xf32, #tpu.memory_space<vmem>>, vector<8x128xf32>,
    return
  }
  func.func @transform_0(%arg0: i32) -> (i32, i32, i32) {
    %c0_i32 = arith.constant 0 : i32
    %c0_i32_0 = arith.constant 0 : i32
    %c0_i32_1 = arith.constant 0 : i32
    return %c0_i32, %arg0, %c0_i32_0 : i32, i32, i32
  }
  func.func @transform_1(%arg0: i32) -> (i32, i32, i32) {
    %c0_i32 = arith.constant 0 : i32
    %c0_i32_0 = arith.constant 0 : i32
    %c0_i32_1 = arith.constant 0 : i32
    %c0_i32_2 = arith.constant 0 : i32
    return %c0_i32, %c0_i32_0, %c0_i32_1 : i32, i32, i32
  }
  func.func @transform_2(%arg0: i32) -> (i32, i32, i32) {
    %c0_i32 = arith.constant 0 : i32
    %c0_i32_0 = arith.constant 0 : i32
    %c0_i32_1 = arith.constant 0 : i32
    %c0_i32_2 = arith.constant 0 : i32
    return %c0_i32, %c0_i32_0, %c0_i32_1 : i32, i32, i32
  }
  func.func @transform_3(%arg0: i32) -> (i32, i32) {
    %c0_i32 = arith.constant 0 : i32
    %c0_i32_0 = arith.constant 0 : i32
    %c0_i32_1 = arith.constant 0 : i32
    return %c0_i32, %c0_i32_0 : i32, i32
  }
  func.func @transform_4(%arg0: i32) -> (i32, i32, i32) {
    %c0_i32 = arith.constant 0 : i32
    %c0_i32_0 = arith.constant 0 : i32
    %c0_i32_1 = arith.constant 0 : i32
    %c0_i32_2 = arith.constant 0 : i32
    return %c0_i32, %c0_i32_0, %c0_i32_1 : i32, i32, i32
  }
  func.func @transform_5(%arg0: i32) -> (i32, i32, i32) {
    %c0_i32 = arith.constant 0 : i32
    %c0_i32_0 = arith.constant 0 : i32
    %c0_i32_1 = arith.constant 0 : i32
    %c0_i32_2 = arith.constant 0 : i32
    return %c0_i32, %c0_i32_0, %c0_i32_1 : i32, i32, i32
  }
  func.func @transform_6(%arg0: i32) -> (i32, i32) {
    %c0_i32 = arith.constant 0 : i32
    %c0_i32_0 = arith.constant 0 : i32
    %c0_i32_1 = arith.constant 0 : i32
    return %c0_i32, %c0_i32_0 : i32, i32
  }
  func.func @transform_7(%arg0: i32) -> (i32, i32) {
    %c0_i32 = arith.constant 0 : i32
    %c0_i32_0 = arith.constant 0 : i32
    return %arg0, %c0_i32 : i32, i32
  }
}

</mosaic_0001>

<llo_original>
// kernel: tpu_custom_call.1
$region0: #{tpu_custom_call.1}
  #allocation0 [shape = 'u32[]', space=smem, size = 0x4, offset = 0x4, fixed_abs, tag = 'smem constant byte address 0x4 - core index']
  #allocation1 [shape = 'u32[144,128]{1,0:T(1,128)}', space=vmem, size = 0x12000, scoped, tag = 'internal scratch']
  %s0 = inlined_call_operand.hbm [shape: bf16[16,8,32], index: 0, kind: input, shape index: {}]
  %s1 = inlined_call_operand.hbm [shape: bf16[3,32,384], index: 1, kind: input, shape index: {}]
  %s2 = inlined_call_operand.hbm [shape: bf16[3,384,128], index: 2, kind: input, shape index: {}]
  %s3 = inlined_call_operand.vmem [shape: f32[1,384], index: 3, kind: input, shape index: {}]
  %s4 = inlined_call_operand.vmem [shape: f32[3,1,128], index: 4, kind: input, shape index: {}]
  %s5 = inlined_call_operand.hbm [shape: bf16[3,128,128], index: 5, kind: input, shape index: {}]
  %s6 = inlined_call_operand.vmem [shape: f32[1,128], index: 6, kind: input, shape index: {}]
  %s7 = inlined_call_operand.hbm [shape: f32[8,128], index: 7, kind: output, shape index: {}]
  %s8 = sld [smem:[#allocation0]]
  $region54: #{tpu_custom_call.1} parent=0
    _
  %s10 = ssub.s32 1, %s8
  %s11 = scalar_select 0, %s10, %s8
  $region1: #{tpu_custom_call.1} parent=0
    #allocation2 [shape = 'u8[32768]{0}', space=vmem, size = 0x8000, scoped, tag = 'input window, operand 0, single buffered']
    #allocation3 [shape = 's32[1]{0}', space=sflag, size = 0x4, scoped, tag = 'scoped memory for tpu_custom_call.1']
    #allocation4 [shape = 's32[1]{0}', space=sflag, size = 0x4, scoped, tag = 'scoped memory for tpu_custom_call.1']
    #allocation5 [shape = 'u8[73728]{0}', space=vmem, size = 0x12000, scoped, tag = 'input window, operand 1, single buffered']
    #allocation6 [shape = 's32[1]{0}', space=sflag, size = 0x4, scoped, tag = 'scoped memory for tpu_custom_call.1']
    #allocation7 [shape = 'u8[294912]{0}', space=vmem, size = 0x48000, scoped, tag = 'input window, operand 2, single buffered']
    #allocation8 [shape = 'u8[98304]{0}', space=vmem, size = 0x18000, scoped, tag = 'input window, operand 5, single buffered']
    #allocation9 [shape = 's32[1]{0}', space=sflag, size = 0x4, scoped, tag = 'scoped memory for tpu_custom_call.1']
    #allocation10 [shape = 'u8[4096]{0}', space=vmem, size = 0x1000, scoped, tag = 'output window, operand 0, single buffered']
    %12 = vsyncpa [#allocation3], 0
    %13 = vsyncpa [#allocation6], 0
    %14 = vsyncpa [#allocation9], 0
    %15 = vsyncpa [#allocation4], 0
    // Predicated region
    $region2: #{tpu_custom_call.1} parent=1 // pred_check
      _
    $region3: #{tpu_custom_call.1} parent=1 // pred_check_branch
      %17 = sbr.rel (0) target = $region5
    $region4: #{tpu_custom_call.1} parent=1 // pred_region
      %s19 = ssub.s32 1024, 1024
      %20 = vsyncadd [#allocation3], %s19
      %s21 = sshll.u32 [#allocation2], 4
      %s22 = int_to_ptr.vmem [resolvable:$true] %s21
      %27 = dma.hbm_to_vmem [thread:$0]  %s0, 1024, %s22, [#allocation3], 64, 64, 4
    $region5: #{tpu_custom_call.1} parent=1 // pred_fallthru
      _
    // Predicated region
    $region6: #{tpu_custom_call.1} parent=1 // pred_check
      _
    $region7: #{tpu_custom_call.1} parent=1 // pred_check_branch
      %29 = sbr.rel (0) target = $region9
    $region8: #{tpu_custom_call.1} parent=1 // pred_region
      %s31 = ssub.s32 2304, 2304
      %32 = vsyncadd [#allocation6], %s31
      %s33 = sshll.u32 [#allocation5], 4
      %s34 = int_to_ptr.vmem [resolvable:$true] %s33
      %39 = dma.hbm_to_vmem [thread:$0]  %s1, 2304, %s34, [#allocation6], 192, 192, 12
    $region9: #{tpu_custom_call.1} parent=1 // pred_fallthru
      _
    // Predicated region
    $region10: #{tpu_custom_call.1} parent=1 // pred_check
      _
    $region11: #{tpu_custom_call.1} parent=1 // pred_check_branch
      %41 = sbr.rel (0) target = $region13
    $region12: #{tpu_custom_call.1} parent=1 // pred_region
      %s43 = ssub.s32 9216, 9216
      %44 = vsyncadd [#allocation6], %s43
      %s45 = sshll.u32 [#allocation7], 4
      %s46 = int_to_ptr.vmem [resolvable:$true] %s45
      %51 = dma.hbm_to_vmem [thread:$0]  %s2, 9216, %s46, [#allocation6], 64, 64, 4
    $region13: #{tpu_custom_call.1} parent=1 // pred_fallthru
      _
    // Predicated region
    $region14: #{tpu_custom_call.1} parent=1 // pred_check
      _
    $region15: #{tpu_custom_call.1} parent=1 // pred_check_branch
      %53 = sbr.rel (0) target = $region17
    $region16: #{tpu_custom_call.1} parent=1 // pred_region
      _
    $region17: #{tpu_custom_call.1} parent=1 // pred_fallthru
      _
    // Predicated region
    $region18: #{tpu_custom_call.1} parent=1 // pred_check
      _
    $region19: #{tpu_custom_call.1} parent=1 // pred_check_branch
      %55 = sbr.rel (0) target = $region21
    $region20: #{tpu_custom_call.1} parent=1 // pred_region
      _
    $region21: #{tpu_custom_call.1} parent=1 // pred_fallthru
      _
    // Predicated region
    $region22: #{tpu_custom_call.1} parent=1 // pred_check
      _
    $region23: #{tpu_custom_call.1} parent=1 // pred_check_branch
      %57 = sbr.rel (0) target = $region25
    $region24: #{tpu_custom_call.1} parent=1 // pred_region
      %s59 = ssub.s32 3072, 3072
      %60 = vsyncadd [#allocation9], %s59
      %s61 = sshll.u32 [#allocation8], 4
      %s62 = int_to_ptr.vmem [resolvable:$true] %s61
      %67 = dma.hbm_to_vmem [thread:$0]  %s5, 3072, %s62, [#allocation9], 64, 64, 4
    $region25: #{tpu_custom_call.1} parent=1 // pred_fallthru
      _
    // Predicated region
    $region26: #{tpu_custom_call.1} parent=1 // pred_check
      _
    $region27: #{tpu_custom_call.1} parent=1 // pred_check_branch
      %69 = sbr.rel (0) target = $region29
    $region28: #{tpu_custom_call.1} parent=1 // pred_region
      _
    $region29: #{tpu_custom_call.1} parent=1 // pred_fallthru
      _
    // Predicated region
    $region30: #{tpu_custom_call.1} parent=1 // pred_check
      _
    $region31: #{tpu_custom_call.1} parent=1 // pred_check_branch
      %71 = sbr.rel (0) target = $region33
    $region32: #{tpu_custom_call.1} parent=1 // pred_region
      %72 = dma.done [#allocation3], 1024
    $region33: #{tpu_custom_call.1} parent=1 // pred_fallthru
      _
    // Predicated region
    $region34: #{tpu_custom_call.1} parent=1 // pred_check
      _
    $region35: #{tpu_custom_call.1} parent=1 // pred_check_branch
      %74 = sbr.rel (0) target = $region37
    $region36: #{tpu_custom_call.1} parent=1 // pred_region
      %75 = dma.done [#allocation6], 2304
    $region37: #{tpu_custom_call.1} parent=1 // pred_fallthru
      _
    // Predicated region
    $region38: #{tpu_custom_call.1} parent=1 // pred_check
      _
    $region39: #{tpu_custom_call.1} parent=1 // pred_check_branch
      %77 = sbr.rel (0) target = $region41
    $region40: #{tpu_custom_call.1} parent=1 // pred_region
      %78 = dma.done [#allocation6], 9216
    $region41: #{tpu_custom_call.1} parent=1 // pred_fallthru
      _
    // Predicated region
    $region42: #{tpu_custom_call.1} parent=1 // pred_check
      _
    $region43: #{tpu_custom_call.1} parent=1 // pred_check_branch
      %80 = sbr.rel (0) target = $region45
    $region44: #{tpu_custom_call.1} parent=1 // pred_region
      %81 = dma.done [#allocation9], 3072
    $region45: #{tpu_custom_call.1} parent=1 // pred_fallthru
      _
    %v84 = vld [vmem:[#allocation2] sm:$0xf]
    %v85 = vld [vmem:[#allocation2 + $0x4] sm:$0xf]
    %v86 = vld [vmem:[#allocation2 + $0x8] sm:$0xf]
    %v87 = vld [vmem:[#allocation2 + $0xc] sm:$0xf]
    %v88 = vld [vmem:[#allocation2 + $0x10] sm:$0xf]
    %v89 = vld [vmem:[#allocation2 + $0x14] sm:$0xf]
    %v90 = vld [vmem:[#allocation2 + $0x18] sm:$0xf]
    %v91 = vld [vmem:[#allocation2 + $0x1c] sm:$0xf]
    %v92 = vld [vmem:[#allocation2 + $0x20] sm:$0xf]
    %v93 = vld [vmem:[#allocation2 + $0x24] sm:$0xf]
    %v94 = vld [vmem:[#allocation2 + $0x28] sm:$0xf]
    %v95 = vld [vmem:[#allocation2 + $0x2c] sm:$0xf]
    %v96 = vld [vmem:[#allocation2 + $0x30] sm:$0xf]
    %v97 = vld [vmem:[#allocation2 + $0x34] sm:$0xf]
    %v98 = vld [vmem:[#allocation2 + $0x38] sm:$0xf]
    %v99 = vld [vmem:[#allocation2 + $0x3c] sm:$0xf]
    %v100 = vld [vmem:[#allocation5] sm:$0xff]
    %v101 = vld [vmem:[#allocation5 + $0x8] sm:$0xf]
    %v102 = vld [vmem:[#allocation5 + $0xc] sm:$0xff]
    %v103 = vld [vmem:[#allocation5 + $0x14] sm:$0xf]
    %v104 = vld [vmem:[#allocation5 + $0x18] sm:$0xff]
    %v105 = vld [vmem:[#allocation5 + $0x20] sm:$0xf]
    %v106 = vld [vmem:[#allocation5 + $0x24] sm:$0xff]
    %v107 = vld [vmem:[#allocation5 + $0x2c] sm:$0xf]
    %s108 = scalar_lea.vmem [#allocation5], 48
    %v109 = vld [vmem:[%s108] sm:$0xff]
    %v110 = vld [vmem:[%s108 + $0x8] sm:$0xf]
    %v111 = vld [vmem:[%s108 + $0xc] sm:$0xff]
    %v112 = vld [vmem:[%s108 + $0x14] sm:$0xf]
    %v113 = vld [vmem:[%s108 + $0x18] sm:$0xff]
    %v114 = vld [vmem:[%s108 + $0x20] sm:$0xf]
    %v115 = vld [vmem:[%s108 + $0x24] sm:$0xff]
    %v116 = vld [vmem:[%s108 + $0x2c] sm:$0xf]
    %v131 = vunpack.c.l.b16 %v85
    %v132 = vunpack.c.l.b16 %v86
    %v133 = vunpack.c.l.b16 %v87
    %v134 = vunpack.c.l.b16 %v88
    %v135 = vunpack.c.l.b16 %v89
    %v136 = vunpack.c.l.b16 %v90
    %v137 = vunpack.c.l.b16 %v91
    %v138 = vunpack.c.l.b16 %v92
    %v139 = vunpack.c.l.b16 %v93
    %v140 = vunpack.c.l.b16 %v94
    %v141 = vunpack.c.l.b16 %v95
    %v142 = vunpack.c.l.b16 %v96
    %v143 = vunpack.c.l.b16 %v97
    %v144 = vunpack.c.l.b16 %v98
    %v145 = vpack.c.b16 %v132, %v131
    %v146 = vpack.c.b16 %v134, %v133
    %v147 = vpack.c.b16 %v136, %v135
    %v148 = vpack.c.b16 %v138, %v137
    %v149 = vpack.c.b16 %v140, %v139
    %v150 = vpack.c.b16 %v142, %v141
    %v151 = vpack.c.b16 %v144, %v143
    %v160 = vunpack.c.l.b16 %v109
    %v161 = vunpack.c.h.b16 %v109
    %v162 = vunpack.c.l.b16 %v110
    %v163 = vunpack.c.l.b16 %v111
    %v164 = vunpack.c.h.b16 %v111
    %v165 = vunpack.c.l.b16 %v112
    %v166 = vunpack.c.l.b16 %v113
    %v167 = vunpack.c.h.b16 %v113
    %v168 = vunpack.c.l.b16 %v114
    %v169 = vunpack.c.l.b16 %v115
    %v170 = vunpack.c.h.b16 %v115
    %v171 = vunpack.c.l.b16 %v116
    %v172 = vpack.c.b16 %v163, %v160
    %v173 = vpack.c.b16 %v164, %v161
    %v174 = vpack.c.b16 %v165, %v162
    %v175 = vpack.c.b16 %v169, %v166
    %v176 = vpack.c.b16 %v170, %v167
    %v177 = vpack.c.b16 %v171, %v168
    %vm184 = vcmask 261120
    %v186 = vsel %vm184, %v145, 0
    %v189 = vsel %vm184, %v146, 0
    %v192 = vsel %vm184, %v147, 0
    %v195 = vsel %vm184, %v148, 0
    %v198 = vsel %vm184, %v149, 0
    %v201 = vsel %vm184, %v150, 0
    %v204 = vsel %vm184, %v151, 0
    %206 = vmatprep.subr.bf16.mxu0 %v173
    %207 = vmatpush1.bf16.msra.mxu0 %v172
    %208 = vmatprep.subr.bf16.mxu0 %v176
    %209 = vmatpush1.bf16.msra.mxu0 %v175
    %210 = vmatprep.subr.bf16.mxu0 0
    %211 = vmatpush1.bf16.msra.mxu0 0
    %212 = vmatprep.subr.bf16.mxu0 0
    %213 = vmatpush1.bf16.msra.mxu0 0
    %214 = vmatprep.subr.bf16.mxu0 0
    %215 = vmatpush1.bf16.msra.mxu0 0
    %216 = vmatprep.subr.bf16.mxu0 0
    %217 = vmatpush1.bf16.msra.mxu0 0
    %218 = vmatprep.subr.bf16.mxu0 0
    %219 = vmatpush1.bf16.msra.mxu0 0
    %220 = vmatprep.subr.bf16.mxu0 0
    %221 = vmatpush1.bf16.msra.mxu0 0
    %222 = vmatprep.subr.bf16.mxu0 0
    %223 = vmatpush1.bf16.msra.mxu0 0
    %224 = vmatprep.subr.bf16.mxu0 0
    %225 = vmatpush1.bf16.msra.mxu0 0
    %226 = vmatprep.subr.bf16.mxu0 0
    %227 = vmatpush1.bf16.msra.mxu0 0
    %228 = vmatprep.subr.bf16.mxu0 0
    %229 = vmatpush1.bf16.msra.mxu0 0
    %230 = vmatprep.subr.bf16.mxu0 0
    %231 = vmatpush1.bf16.msra.mxu0 0
    %232 = vmatprep.subr.bf16.mxu0 0
    %233 = vmatpush1.bf16.msra.mxu0 0
    %234 = vmatprep.subr.bf16.mxu0 0
    %235 = vmatpush1.bf16.msra.mxu0 0
    %236 = vmatprep.subr.bf16.mxu0 0
    %237 = vmatpush1.bf16.msra.mxu0 0
    %238 = vmatprep.mubr.bf16.mxu0 0
    %239 = vmatmul.mubr.bf16.gmra.mrb[0].mxu0 %v186
    %v240 = vpop.f32.mrb[0].mxu0
    %v241 = vadd.f32 0.0, %v240
    %v242 = vpop.f32.mrb[0].mxu0
    %v243 = vadd.f32 0.0, %v242
    %v244 = vpop.f32.mrb[0].mxu0
    %v245 = vadd.f32 0.0, %v244
    %v246 = vpop.f32.mrb[0].mxu0
    %v247 = vadd.f32 0.0, %v246
    %248 = vmatprep.mubr.bf16.mxu0 0
    %249 = vmatmul.mubr.bf16.gmra.mrb[0].mxu0 %v189
    %v250 = vpop.f32.mrb[0].mxu0
    %v251 = vadd.f32 0.0, %v250
    %v252 = vpop.f32.mrb[0].mxu0
    %v253 = vadd.f32 0.0, %v252
    %v254 = vpop.f32.mrb[0].mxu0
    %v255 = vadd.f32 0.0, %v254
    %v256 = vpop.f32.mrb[0].mxu0
    %v257 = vadd.f32 0.0, %v256
    %258 = vmatprep.mubr.bf16.mxu0 0
    %259 = vmatmul.mubr.bf16.gmra.mrb[0].mxu0 %v192
    %v260 = vpop.f32.mrb[0].mxu0
    %v261 = vadd.f32 0.0, %v260
    %v262 = vpop.f32.mrb[0].mxu0
    %v263 = vadd.f32 0.0, %v262
    %v264 = vpop.f32.mrb[0].mxu0
    %v265 = vadd.f32 0.0, %v264
    %v266 = vpop.f32.mrb[0].mxu0
    %v267 = vadd.f32 0.0, %v266
    %268 = vmatprep.mubr.bf16.mxu0 0
    %269 = vmatmul.mubr.bf16.gmra.mrb[0].mxu0 %v195
    %v270 = vpop.f32.mrb[0].mxu0
    %v271 = vadd.f32 0.0, %v270
    %v272 = vpop.f32.mrb[0].mxu0
    %v273 = vadd.f32 0.0, %v272
    %v274 = vpop.f32.mrb[0].mxu0
    %v275 = vadd.f32 0.0, %v274
    %v276 = vpop.f32.mrb[0].mxu0
    %v277 = vadd.f32 0.0, %v276
    %278 = vmatprep.mubr.bf16.mxu0 0
    %279 = vmatmul.mubr.bf16.gmra.mrb[0].mxu0 %v198
    %v280 = vpop.f32.mrb[0].mxu0
    %v281 = vadd.f32 0.0, %v280
    %v282 = vpop.f32.mrb[0].mxu0
    %v283 = vadd.f32 0.0, %v282
    %v284 = vpop.f32.mrb[0].mxu0
    %v285 = vadd.f32 0.0, %v284
    %v286 = vpop.f32.mrb[0].mxu0
    %v287 = vadd.f32 0.0, %v286
    %288 = vmatprep.mubr.bf16.mxu0 0
    %289 = vmatmul.mubr.bf16.gmra.mrb[0].mxu0 %v201
    %v290 = vpop.f32.mrb[0].mxu0
    %v291 = vadd.f32 0.0, %v290
    %v292 = vpop.f32.mrb[0].mxu0
    %v293 = vadd.f32 0.0, %v292
    %v294 = vpop.f32.mrb[0].mxu0
    %v295 = vadd.f32 0.0, %v294
    %v296 = vpop.f32.mrb[0].mxu0
    %v297 = vadd.f32 0.0, %v296
    %298 = vmatprep.mubr.bf16.mxu0 0
    %299 = vmatmul.mubr.bf16.gmra.mrb[0].mxu0 %v204
    %v300 = vpop.f32.mrb[0].mxu0
    %v301 = vadd.f32 0.0, %v300
    %v302 = vpop.f32.mrb[0].mxu0
    %v303 = vadd.f32 0.0, %v302
    %v304 = vpop.f32.mrb[0].mxu0
    %v305 = vadd.f32 0.0, %v304
    %v306 = vpop.f32.mrb[0].mxu0
    %v307 = vadd.f32 0.0, %v306
    %308 = vdwg.mxu0
    %309 = vmatprep.subr.bf16.mxu0 0
    %310 = vmatpush1.bf16.msra.mxu0 %v174
    %311 = vmatprep.subr.bf16.mxu0 0
    %312 = vmatpush1.bf16.msra.mxu0 %v177
    %313 = vmatprep.subr.bf16.mxu0 0
    %314 = vmatpush1.bf16.msra.mxu0 0
    %315 = vmatprep.subr.bf16.mxu0 0
    %316 = vmatpush1.bf16.msra.mxu0 0
    %317 = vmatprep.subr.bf16.mxu0 0
    %318 = vmatpush1.bf16.msra.mxu0 0
    %319 = vmatprep.subr.bf16.mxu0 0
    %320 = vmatpush1.bf16.msra.mxu0 0
    %321 = vmatprep.subr.bf16.mxu0 0
    %322 = vmatpush1.bf16.msra.mxu0 0
    %323 = vmatprep.subr.bf16.mxu0 0
    %324 = vmatpush1.bf16.msra.mxu0 0
    %325 = vmatprep.subr.bf16.mxu0 0
    %326 = vmatpush1.bf16.msra.mxu0 0
    %327 = vmatprep.subr.bf16.mxu0 0
    %328 = vmatpush1.bf16.msra.mxu0 0
    %329 = vmatprep.subr.bf16.mxu0 0
    %330 = vmatpush1.bf16.msra.mxu0 0
    %331 = vmatprep.subr.bf16.mxu0 0
    %332 = vmatpush1.bf16.msra.mxu0 0
    %333 = vmatprep.subr.bf16.mxu0 0
    %334 = vmatpush1.bf16.msra.mxu0 0
    %335 = vmatprep.subr.bf16.mxu0 0
    %336 = vmatpush1.bf16.msra.mxu0 0
    %337 = vmatprep.subr.bf16.mxu0 0
    %338 = vmatpush1.bf16.msra.mxu0 0
    %339 = vmatprep.subr.bf16.mxu0 0
    %340 = vmatpush1.bf16.msra.mxu0 0
    %341 = vmatprep.mubr.bf16.mxu0 0
    %342 = vmatmul.mubr.bf16.gmra.mrb[0].mxu0 %v186
    %v343 = vpop.f32.mrb[0].mxu0
    %v344 = vadd.f32 0.0, %v343
    %v345 = vpop.f32.mrb[0].mxu0
    %v346 = vpop.f32.mrb[0].mxu0
    %v347 = vadd.f32 0.0, %v346
    %v348 = vpop.f32.mrb[0].mxu0
    %349 = vmatprep.mubr.bf16.mxu0 0
    %350 = vmatmul.mubr.bf16.gmra.mrb[0].mxu0 %v189
    %v351 = vpop.f32.mrb[0].mxu0
    %v352 = vadd.f32 0.0, %v351
    %v353 = vpop.f32.mrb[0].mxu0
    %v354 = vpop.f32.mrb[0].mxu0
    %v355 = vadd.f32 0.0, %v354
    %v356 = vpop.f32.mrb[0].mxu0
    %357 = vmatprep.mubr.bf16.mxu0 0
    %358 = vmatmul.mubr.bf16.gmra.mrb[0].mxu0 %v192
    %v359 = vpop.f32.mrb[0].mxu0
    %v360 = vadd.f32 0.0, %v359
    %v361 = vpop.f32.mrb[0].mxu0
    %v362 = vpop.f32.mrb[0].mxu0
    %v363 = vadd.f32 0.0, %v362
    %v364 = vpop.f32.mrb[0].mxu0
    %365 = vmatprep.mubr.bf16.mxu0 0
    %366 = vmatmul.mubr.bf16.gmra.mrb[0].mxu0 %v195
    %v367 = vpop.f32.mrb[0].mxu0
    %v368 = vadd.f32 0.0, %v367
    %v369 = vpop.f32.mrb[0].mxu0
    %v370 = vpop.f32.mrb[0].mxu0
    %v371 = vadd.f32 0.0, %v370
    %v372 = vpop.f32.mrb[0].mxu0
    %373 = vmatprep.mubr.bf16.mxu0 0
    %374 = vmatmul.mubr.bf16.gmra.mrb[0].mxu0 %v198
    %v375 = vpop.f32.mrb[0].mxu0
    %v376 = vadd.f32 0.0, %v375
    %v377 = vpop.f32.mrb[0].mxu0
    %v378 = vpop.f32.mrb[0].mxu0
    %v379 = vadd.f32 0.0, %v378
    %v380 = vpop.f32.mrb[0].mxu0
    %381 = vmatprep.mubr.bf16.mxu0 0
    %382 = vmatmul.mubr.bf16.gmra.mrb[0].mxu0 %v201
    %v383 = vpop.f32.mrb[0].mxu0
    %v384 = vadd.f32 0.0, %v383
    %v385 = vpop.f32.mrb[0].mxu0
    %v386 = vpop.f32.mrb[0].mxu0
    %v387 = vadd.f32 0.0, %v386
    %v388 = vpop.f32.mrb[0].mxu0
    %389 = vmatprep.mubr.bf16.mxu0 0
    %390 = vmatmul.mubr.bf16.gmra.mrb[0].mxu0 %v204
    %v391 = vpop.f32.mrb[0].mxu0
    %v392 = vadd.f32 0.0, %v391
    %v393 = vpop.f32.mrb[0].mxu0
    %v394 = vpop.f32.mrb[0].mxu0
    %v395 = vadd.f32 0.0, %v394
    %v396 = vpop.f32.mrb[0].mxu0
    %397 = vdwg.mxu0
    %v399 = vunpack.c.l.b16 %v84
    %v400 = vpack.c.b16 %v131, %v399
    %v401 = vpack.c.b16 %v133, %v132
    %v402 = vpack.c.b16 %v135, %v134
    %v403 = vpack.c.b16 %v137, %v136
    %v404 = vpack.c.b16 %v139, %v138
    %v405 = vpack.c.b16 %v141, %v140
    %v406 = vpack.c.b16 %v143, %v142
    %v415 = vunpack.c.l.b16 %v100
    %v416 = vunpack.c.h.b16 %v100
    %v417 = vunpack.c.l.b16 %v101
    %v418 = vunpack.c.l.b16 %v102
    %v419 = vunpack.c.h.b16 %v102
    %v420 = vunpack.c.l.b16 %v103
    %v421 = vunpack.c.l.b16 %v104
    %v422 = vunpack.c.h.b16 %v104
    %v423 = vunpack.c.l.b16 %v105
    %v424 = vunpack.c.l.b16 %v106
    %v425 = vunpack.c.h.b16 %v106
    %v426 = vunpack.c.l.b16 %v107
    %v427 = vpack.c.b16 %v418, %v415
    %v428 = vpack.c.b16 %v419, %v416
    %v429 = vpack.c.b16 %v420, %v417
    %v430 = vpack.c.b16 %v424, %v421
    %v431 = vpack.c.b16 %v425, %v422
    %v432 = vpack.c.b16 %v426, %v423
    %v440 = vsel %vm184, %v400, 0
    %v443 = vsel %vm184, %v401, 0
    %v446 = vsel %vm184, %v402, 0
    %v449 = vsel %vm184, %v403, 0
    %v452 = vsel %vm184, %v404, 0
    %v455 = vsel %vm184, %v405, 0
    %v458 = vsel %vm184, %v406, 0
    %460 = vmatprep.subr.bf16.mxu0 %v428
    %461 = vmatpush1.bf16.msra.mxu0 %v427
    %462 = vmatprep.subr.bf16.mxu0 %v431
    %463 = vmatpush1.bf16.msra.mxu0 %v430
    %464 = vmatprep.subr.bf16.mxu0 0
    %465 = vmatpush1.bf16.msra.mxu0 0
    %466 = vmatprep.subr.bf16.mxu0 0
    %467 = vmatpush1.bf16.msra.mxu0 0
    %468 = vmatprep.subr.bf16.mxu0 0
    %469 = vmatpush1.bf16.msra.mxu0 0
    %470 = vmatprep.subr.bf16.mxu0 0
    %471 = vmatpush1.bf16.msra.mxu0 0
    %472 = vmatprep.subr.bf16.mxu0 0
    %473 = vmatpush1.bf16.msra.mxu0 0
    %474 = vmatprep.subr.bf16.mxu0 0
    %475 = vmatpush1.bf16.msra.mxu0 0
    %476 = vmatprep.subr.bf16.mxu0 0
    %477 = vmatpush1.bf16.msra.mxu0 0
    %478 = vmatprep.subr.bf16.mxu0 0
    %479 = vmatpush1.bf16.msra.mxu0 0
    %480 = vmatprep.subr.bf16.mxu0 0
    %481 = vmatpush1.bf16.msra.mxu0 0
    %482 = vmatprep.subr.bf16.mxu0 0
    %483 = vmatpush1.bf16.msra.mxu0 0
    %484 = vmatprep.subr.bf16.mxu0 0
    %485 = vmatpush1.bf16.msra.mxu0 0
    %486 = vmatprep.subr.bf16.mxu0 0
    %487 = vmatpush1.bf16.msra.mxu0 0
    %488 = vmatprep.subr.bf16.mxu0 0
    %489 = vmatpush1.bf16.msra.mxu0 0
    %490 = vmatprep.subr.bf16.mxu0 0
    %491 = vmatpush1.bf16.msra.mxu0 0
    %492 = vmatprep.mubr.bf16.mxu0 0
    %493 = vmatmul.mubr.bf16.gmra.mrb[0].mxu0 %v440
    %v494 = vpop.f32.mrb[0].mxu0
    %v495 = vadd.f32 %v241, %v494
    %v496 = vpop.f32.mrb[0].mxu0
    %v497 = vadd.f32 %v243, %v496
    %v498 = vpop.f32.mrb[0].mxu0
    %v499 = vadd.f32 %v245, %v498
    %v500 = vpop.f32.mrb[0].mxu0
    %v501 = vadd.f32 %v247, %v500
    %502 = vmatprep.mubr.bf16.mxu0 0
    %503 = vmatmul.mubr.bf16.gmra.mrb[0].mxu0 %v443
    %v504 = vpop.f32.mrb[0].mxu0
    %v505 = vadd.f32 %v251, %v504
    %v506 = vpop.f32.mrb[0].mxu0
    %v507 = vadd.f32 %v253, %v506
    %v508 = vpop.f32.mrb[0].mxu0
    %v509 = vadd.f32 %v255, %v508
    %v510 = vpop.f32.mrb[0].mxu0
    %v511 = vadd.f32 %v257, %v510
    %512 = vmatprep.mubr.bf16.mxu0 0
    %513 = vmatmul.mubr.bf16.gmra.mrb[0].mxu0 %v446
    %v514 = vpop.f32.mrb[0].mxu0
    %v515 = vadd.f32 %v261, %v514
    %v516 = vpop.f32.mrb[0].mxu0
    %v517 = vadd.f32 %v263, %v516
    %v518 = vpop.f32.mrb[0].mxu0
    %v519 = vadd.f32 %v265, %v518
    %v520 = vpop.f32.mrb[0].mxu0
    %v521 = vadd.f32 %v267, %v520
    %522 = vmatprep.mubr.bf16.mxu0 0
    %523 = vmatmul.mubr.bf16.gmra.mrb[0].mxu0 %v449
    %v524 = vpop.f32.mrb[0].mxu0
    %v525 = vadd.f32 %v271, %v524
    %v526 = vpop.f32.mrb[0].mxu0
    %v527 = vadd.f32 %v273, %v526
    %v528 = vpop.f32.mrb[0].mxu0
    %v529 = vadd.f32 %v275, %v528
    %v530 = vpop.f32.mrb[0].mxu0
    %v531 = vadd.f32 %v277, %v530
    %532 = vmatprep.mubr.bf16.mxu0 0
    %533 = vmatmul.mubr.bf16.gmra.mrb[0].mxu0 %v452
    %v534 = vpop.f32.mrb[0].mxu0
    %v535 = vadd.f32 %v281, %v534
    %v536 = vpop.f32.mrb[0].mxu0
    %v537 = vadd.f32 %v283, %v536
    %v538 = vpop.f32.mrb[0].mxu0
    %v539 = vadd.f32 %v285, %v538
    %v540 = vpop.f32.mrb[0].mxu0
    %v541 = vadd.f32 %v287, %v540
    %542 = vmatprep.mubr.bf16.mxu0 0
    %543 = vmatmul.mubr.bf16.gmra.mrb[0].mxu0 %v455
    %v544 = vpop.f32.mrb[0].mxu0
    %v545 = vadd.f32 %v291, %v544
    %v546 = vpop.f32.mrb[0].mxu0
    %v547 = vadd.f32 %v293, %v546
    %v548 = vpop.f32.mrb[0].mxu0
    %v549 = vadd.f32 %v295, %v548
    %v550 = vpop.f32.mrb[0].mxu0
    %v551 = vadd.f32 %v297, %v550
    %552 = vmatprep.mubr.bf16.mxu0 0
    %553 = vmatmul.mubr.bf16.gmra.mrb[0].mxu0 %v458
    %v554 = vpop.f32.mrb[0].mxu0
    %v555 = vadd.f32 %v301, %v554
    %v556 = vpop.f32.mrb[0].mxu0
    %v557 = vadd.f32 %v303, %v556
    %v558 = vpop.f32.mrb[0].mxu0
    %v559 = vadd.f32 %v305, %v558
    %v560 = vpop.f32.mrb[0].mxu0
    %v561 = vadd.f32 %v307, %v560
    %562 = vdwg.mxu0
    %563 = vmatprep.subr.bf16.mxu0 0
    %564 = vmatpush1.bf16.msra.mxu0 %v429
    %565 = vmatprep.subr.bf16.mxu0 0
    %566 = vmatpush1.bf16.msra.mxu0 %v432
    %567 = vmatprep.subr.bf16.mxu0 0
    %568 = vmatpush1.bf16.msra.mxu0 0
    %569 = vmatprep.subr.bf16.mxu0 0
    %570 = vmatpush1.bf16.msra.mxu0 0
    %571 = vmatprep.subr.bf16.mxu0 0
    %572 = vmatpush1.bf16.msra.mxu0 0
    %573 = vmatprep.subr.bf16.mxu0 0
    %574 = vmatpush1.bf16.msra.mxu0 0
    %575 = vmatprep.subr.bf16.mxu0 0
    %576 = vmatpush1.bf16.msra.mxu0 0
    %577 = vmatprep.subr.bf16.mxu0 0
    %578 = vmatpush1.bf16.msra.mxu0 0
    %579 = vmatprep.subr.bf16.mxu0 0
    %580 = vmatpush1.bf16.msra.mxu0 0
    %581 = vmatprep.subr.bf16.mxu0 0
    %582 = vmatpush1.bf16.msra.mxu0 0
    %583 = vmatprep.subr.bf16.mxu0 0
    %584 = vmatpush1.bf16.msra.mxu0 0
    %585 = vmatprep.subr.bf16.mxu0 0
    %586 = vmatpush1.bf16.msra.mxu0 0
    %587 = vmatprep.subr.bf16.mxu0 0
    %588 = vmatpush1.bf16.msra.mxu0 0
    %589 = vmatprep.subr.bf16.mxu0 0
    %590 = vmatpush1.bf16.msra.mxu0 0
    %591 = vmatprep.subr.bf16.mxu0 0
    %592 = vmatpush1.bf16.msra.mxu0 0
    %593 = vmatprep.subr.bf16.mxu0 0
    %594 = vmatpush1.bf16.msra.mxu0 0
    %595 = vmatprep.mubr.bf16.mxu0 0
    %596 = vmatmul.mubr.bf16.gmra.mrb[0].mxu0 %v440
    %v597 = vpop.f32.mrb[0].mxu0
    %v598 = vadd.f32 %v344, %v597
    %v599 = vpop.f32.mrb[0].mxu0
    %v600 = vpop.f32.mrb[0].mxu0
    %v601 = vadd.f32 %v347, %v600
    %v602 = vpop.f32.mrb[0].mxu0
    %603 = vmatprep.mubr.bf16.mxu0 0
    %604 = vmatmul.mubr.bf16.gmra.mrb[0].mxu0 %v443
    %v605 = vpop.f32.mrb[0].mxu0
    %v606 = vadd.f32 %v352, %v605
    %v607 = vpop.f32.mrb[0].mxu0
    %v608 = vpop.f32.mrb[0].mxu0
    %v609 = vadd.f32 %v355, %v608
    %v610 = vpop.f32.mrb[0].mxu0
    %611 = vmatprep.mubr.bf16.mxu0 0
    %612 = vmatmul.mubr.bf16.gmra.mrb[0].mxu0 %v446
    %v613 = vpop.f32.mrb[0].mxu0
    %v614 = vadd.f32 %v360, %v613
    %v615 = vpop.f32.mrb[0].mxu0
    %v616 = vpop.f32.mrb[0].mxu0
    %v617 = vadd.f32 %v363, %v616
    %v618 = vpop.f32.mrb[0].mxu0
    %619 = vmatprep.mubr.bf16.mxu0 0
    %620 = vmatmul.mubr.bf16.gmra.mrb[0].mxu0 %v449
    %v621 = vpop.f32.mrb[0].mxu0
    %v622 = vadd.f32 %v368, %v621
    %v623 = vpop.f32.mrb[0].mxu0
    %v624 = vpop.f32.mrb[0].mxu0
    %v625 = vadd.f32 %v371, %v624
    %v626 = vpop.f32.mrb[0].mxu0
    %627 = vmatprep.mubr.bf16.mxu0 0
    %628 = vmatmul.mubr.bf16.gmra.mrb[0].mxu0 %v452
    %v629 = vpop.f32.mrb[0].mxu0
    %v630 = vadd.f32 %v376, %v629
    %v631 = vpop.f32.mrb[0].mxu0
    %v632 = vpop.f32.mrb[0].mxu0
    %v633 = vadd.f32 %v379, %v632
    %v634 = vpop.f32.mrb[0].mxu0
    %635 = vmatprep.mubr.bf16.mxu0 0
    %636 = vmatmul.mubr.bf16.gmra.mrb[0].mxu0 %v455
    %v637 = vpop.f32.mrb[0].mxu0
    %v638 = vadd.f32 %v384, %v637
    %v639 = vpop.f32.mrb[0].mxu0
    %v640 = vpop.f32.mrb[0].mxu0
    %v641 = vadd.f32 %v387, %v640
    %v642 = vpop.f32.mrb[0].mxu0
    %643 = vmatprep.mubr.bf16.mxu0 0
    %644 = vmatmul.mubr.bf16.gmra.mrb[0].mxu0 %v458
    %v645 = vpop.f32.mrb[0].mxu0
    %v646 = vadd.f32 %v392, %v645
    %v647 = vpop.f32.mrb[0].mxu0
    %v648 = vpop.f32.mrb[0].mxu0
    %v649 = vadd.f32 %v395, %v648
    %v650 = vpop.f32.mrb[0].mxu0
    %651 = vdwg.mxu0
    %s652 = scalar_lea.vmem [#allocation5], 96
    %v653 = vld [vmem:[%s652] sm:$0xff]
    %v654 = vld [vmem:[%s652 + $0x8] sm:$0xf]
    %v655 = vld [vmem:[%s652 + $0xc] sm:$0xff]
    %v656 = vld [vmem:[%s652 + $0x14] sm:$0xf]
    %v657 = vld [vmem:[%s652 + $0x18] sm:$0xff]
    %v658 = vld [vmem:[%s652 + $0x20] sm:$0xf]
    %v659 = vld [vmem:[%s652 + $0x24] sm:$0xff]
    %v660 = vld [vmem:[%s652 + $0x2c] sm:$0xf]
    %v662 = vunpack.c.l.b16 %v99
    %v663 = vpack.c.b16 %v662, %v144
    %v672 = vunpack.c.l.b16 %v653
    %v673 = vunpack.c.h.b16 %v653
    %v674 = vunpack.c.l.b16 %v654
    %v675 = vunpack.c.l.b16 %v655
    %v676 = vunpack.c.h.b16 %v655
    %v677 = vunpack.c.l.b16 %v656
    %v678 = vunpack.c.l.b16 %v657
    %v679 = vunpack.c.h.b16 %v657
    %v680 = vunpack.c.l.b16 %v658
    %v681 = vunpack.c.l.b16 %v659
    %v682 = vunpack.c.h.b16 %v659
    %v683 = vunpack.c.l.b16 %v660
    %v684 = vpack.c.b16 %v675, %v672
    %v685 = vpack.c.b16 %v676, %v673
    %v686 = vpack.c.b16 %v677, %v674
    %v687 = vpack.c.b16 %v681, %v678
    %v688 = vpack.c.b16 %v682, %v679
    %v689 = vpack.c.b16 %v683, %v680
    %v697 = vsel %vm184, %v663, 0
    %699 = vmatprep.subr.bf16.mxu0 %v685
    %700 = vmatpush1.bf16.msra.mxu0 %v684
    %701 = vmatprep.subr.bf16.mxu0 %v688
    %702 = vmatpush1.bf16.msra.mxu0 %v687
    %703 = vmatprep.subr.bf16.mxu0 0
    %704 = vmatpush1.bf16.msra.mxu0 0
    %705 = vmatprep.subr.bf16.mxu0 0
    %706 = vmatpush1.bf16.msra.mxu0 0
    %707 = vmatprep.subr.bf16.mxu0 0
    %708 = vmatpush1.bf16.msra.mxu0 0
    %709 = vmatprep.subr.bf16.mxu0 0
    %710 = vmatpush1.bf16.msra.mxu0 0
    %711 = vmatprep.subr.bf16.mxu0 0
    %712 = vmatpush1.bf16.msra.mxu0 0
    %713 = vmatprep.subr.bf16.mxu0 0
    %714 = vmatpush1.bf16.msra.mxu0 0
    %715 = vmatprep.subr.bf16.mxu0 0
    %716 = vmatpush1.bf16.msra.mxu0 0
    %717 = vmatprep.subr.bf16.mxu0 0
    %718 = vmatpush1.bf16.msra.mxu0 0
    %719 = vmatprep.subr.bf16.mxu0 0
    %720 = vmatpush1.bf16.msra.mxu0 0
    %721 = vmatprep.subr.bf16.mxu0 0
    %722 = vmatpush1.bf16.msra.mxu0 0
    %723 = vmatprep.subr.bf16.mxu0 0
    %724 = vmatpush1.bf16.msra.mxu0 0
    %725 = vmatprep.subr.bf16.mxu0 0
    %726 = vmatpush1.bf16.msra.mxu0 0
    %727 = vmatprep.subr.bf16.mxu0 0
    %728 = vmatpush1.bf16.msra.mxu0 0
    %729 = vmatprep.subr.bf16.mxu0 0
    %730 = vmatpush1.bf16.msra.mxu0 0
    %731 = vmatprep.mubr.bf16.mxu0 0
    %732 = vmatmul.mubr.bf16.gmra.mrb[0].mxu0 %v443
    %v733 = vpop.f32.mrb[0].mxu0
    %v734 = vadd.f32 0.0, %v733
    %v735 = vpop.f32.mrb[0].mxu0
    %v736 = vadd.f32 0.0, %v735
    %v737 = vpop.f32.mrb[0].mxu0
    %v738 = vadd.f32 0.0, %v737
    %v739 = vpop.f32.mrb[0].mxu0
    %v740 = vadd.f32 0.0, %v739
    %741 = vmatprep.mubr.bf16.mxu0 0
    %742 = vmatmul.mubr.bf16.gmra.mrb[0].mxu0 %v446
    %v743 = vpop.f32.mrb[0].mxu0
    %v744 = vadd.f32 0.0, %v743
    %v745 = vpop.f32.mrb[0].mxu0
    %v746 = vadd.f32 0.0, %v745
    %v747 = vpop.f32.mrb[0].mxu0
    %v748 = vadd.f32 0.0, %v747
    %v749 = vpop.f32.mrb[0].mxu0
    %v750 = vadd.f32 0.0, %v749
    %751 = vmatprep.mubr.bf16.mxu0 0
    %752 = vmatmul.mubr.bf16.gmra.mrb[0].mxu0 %v449
    %v753 = vpop.f32.mrb[0].mxu0
    %v754 = vadd.f32 0.0, %v753
    %v755 = vpop.f32.mrb[0].mxu0
    %v756 = vadd.f32 0.0, %v755
    %v757 = vpop.f32.mrb[0].mxu0
    %v758 = vadd.f32 0.0, %v757
    %v759 = vpop.f32.mrb[0].mxu0
    %v760 = vadd.f32 0.0, %v759
    %761 = vmatprep.mubr.bf16.mxu0 0
    %762 = vmatmul.mubr.bf16.gmra.mrb[0].mxu0 %v452
    %v763 = vpop.f32.mrb[0].mxu0
    %v764 = vadd.f32 0.0, %v763
    %v765 = vpop.f32.mrb[0].mxu0
    %v766 = vadd.f32 0.0, %v765
    %v767 = vpop.f32.mrb[0].mxu0
    %v768 = vadd.f32 0.0, %v767
    %v769 = vpop.f32.mrb[0].mxu0
    %v770 = vadd.f32 0.0, %v769
    %771 = vmatprep.mubr.bf16.mxu0 0
    %772 = vmatmul.mubr.bf16.gmra.mrb[0].mxu0 %v455
    %v773 = vpop.f32.mrb[0].mxu0
    %v774 = vadd.f32 0.0, %v773
    %v775 = vpop.f32.mrb[0].mxu0
    %v776 = vadd.f32 0.0, %v775
    %v777 = vpop.f32.mrb[0].mxu0
    %v778 = vadd.f32 0.0, %v777
    %v779 = vpop.f32.mrb[0].mxu0
    %v780 = vadd.f32 0.0, %v779
    %781 = vmatprep.mubr.bf16.mxu0 0
    %782 = vmatmul.mubr.bf16.gmra.mrb[0].mxu0 %v458
    %v783 = vpop.f32.mrb[0].mxu0
    %v784 = vadd.f32 0.0, %v783
    %v785 = vpop.f32.mrb[0].mxu0
    %v786 = vadd.f32 0.0, %v785
    %v787 = vpop.f32.mrb[0].mxu0
    %v788 = vadd.f32 0.0, %v787
    %v789 = vpop.f32.mrb[0].mxu0
    %v790 = vadd.f32 0.0, %v789
    %791 = vmatprep.mubr.bf16.mxu0 0
    %792 = vmatmul.mubr.bf16.gmra.mrb[0].mxu0 %v697
    %v793 = vpop.f32.mrb[0].mxu0
    %v794 = vadd.f32 0.0, %v793
    %v795 = vpop.f32.mrb[0].mxu0
    %v796 = vadd.f32 0.0, %v795
    %v797 = vpop.f32.mrb[0].mxu0
    %v798 = vadd.f32 0.0, %v797
    %v799 = vpop.f32.mrb[0].mxu0
    %v800 = vadd.f32 0.0, %v799
    %801 = vdwg.mxu0
    %802 = vmatprep.subr.bf16.mxu0 0
    %803 = vmatpush1.bf16.msra.mxu0 %v686
    %804 = vmatprep.subr.bf16.mxu0 0
    %805 = vmatpush1.bf16.msra.mxu0 %v689
    %806 = vmatprep.subr.bf16.mxu0 0
    %807 = vmatpush1.bf16.msra.mxu0 0
    %808 = vmatprep.subr.bf16.mxu0 0
    %809 = vmatpush1.bf16.msra.mxu0 0
    %810 = vmatprep.subr.bf16.mxu0 0
    %811 = vmatpush1.bf16.msra.mxu0 0
    %812 = vmatprep.subr.bf16.mxu0 0
    %813 = vmatpush1.bf16.msra.mxu0 0
    %814 = vmatprep.subr.bf16.mxu0 0
    %815 = vmatpush1.bf16.msra.mxu0 0
    %816 = vmatprep.subr.bf16.mxu0 0
    %817 = vmatpush1.bf16.msra.mxu0 0
    %818 = vmatprep.subr.bf16.mxu0 0
    %819 = vmatpush1.bf16.msra.mxu0 0
    %820 = vmatprep.subr.bf16.mxu0 0
    %821 = vmatpush1.bf16.msra.mxu0 0
    %822 = vmatprep.subr.bf16.mxu0 0
    %823 = vmatpush1.bf16.msra.mxu0 0
    %824 = vmatprep.subr.bf16.mxu0 0
    %825 = vmatpush1.bf16.msra.mxu0 0
    %826 = vmatprep.subr.bf16.mxu0 0
    %827 = vmatpush1.bf16.msra.mxu0 0
    %828 = vmatprep.subr.bf16.mxu0 0
    %829 = vmatpush1.bf16.msra.mxu0 0
    %830 = vmatprep.subr.bf16.mxu0 0
    %831 = vmatpush1.bf16.msra.mxu0 0
    %832 = vmatprep.subr.bf16.mxu0 0
    %833 = vmatpush1.bf16.msra.mxu0 0
    %834 = vmatprep.mubr.bf16.mxu0 0
    %835 = vmatmul.mubr.bf16.gmra.mrb[0].mxu0 %v443
    %v836 = vpop.f32.mrb[0].mxu0
    %v837 = vadd.f32 0.0, %v836
    %v838 = vpop.f32.mrb[0].mxu0
    %v839 = vpop.f32.mrb[0].mxu0
    %v840 = vadd.f32 0.0, %v839
    %v841 = vpop.f32.mrb[0].mxu0
    %842 = vmatprep.mubr.bf16.mxu0 0
    %843 = vmatmul.mubr.bf16.gmra.mrb[0].mxu0 %v446
    %v844 = vpop.f32.mrb[0].mxu0
    %v845 = vadd.f32 0.0, %v844
    %v846 = vpop.f32.mrb[0].mxu0
    %v847 = vpop.f32.mrb[0].mxu0
    %v848 = vadd.f32 0.0, %v847
    %v849 = vpop.f32.mrb[0].mxu0
    %850 = vmatprep.mubr.bf16.mxu0 0
    %851 = vmatmul.mubr.bf16.gmra.mrb[0].mxu0 %v449
    %v852 = vpop.f32.mrb[0].mxu0
    %v853 = vadd.f32 0.0, %v852
    %v854 = vpop.f32.mrb[0].mxu0
    %v855 = vpop.f32.mrb[0].mxu0
    %v856 = vadd.f32 0.0, %v855
    %v857 = vpop.f32.mrb[0].mxu0
    %858 = vmatprep.mubr.bf16.mxu0 0
    %859 = vmatmul.mubr.bf16.gmra.mrb[0].mxu0 %v452
    %v860 = vpop.f32.mrb[0].mxu0
    %v861 = vadd.f32 0.0, %v860
    %v862 = vpop.f32.mrb[0].mxu0
    %v863 = vpop.f32.mrb[0].mxu0
    %v864 = vadd.f32 0.0, %v863
    %v865 = vpop.f32.mrb[0].mxu0
    %866 = vmatprep.mubr.bf16.mxu0 0
    %867 = vmatmul.mubr.bf16.gmra.mrb[0].mxu0 %v455
    %v868 = vpop.f32.mrb[0].mxu0
    %v869 = vadd.f32 0.0, %v868
    %v870 = vpop.f32.mrb[0].mxu0
    %v871 = vpop.f32.mrb[0].mxu0
    %v872 = vadd.f32 0.0, %v871
    %v873 = vpop.f32.mrb[0].mxu0
    %874 = vmatprep.mubr.bf16.mxu0 0
    %875 = vmatmul.mubr.bf16.gmra.mrb[0].mxu0 %v458
    %v876 = vpop.f32.mrb[0].mxu0
    %v877 = vadd.f32 0.0, %v876
    %v878 = vpop.f32.mrb[0].mxu0
    %v879 = vpop.f32.mrb[0].mxu0
    %v880 = vadd.f32 0.0, %v879
    %v881 = vpop.f32.mrb[0].mxu0
    %882 = vmatprep.mubr.bf16.mxu0 0
    %883 = vmatmul.mubr.bf16.gmra.mrb[0].mxu0 %v697
    %v884 = vpop.f32.mrb[0].mxu0
    %v885 = vadd.f32 0.0, %v884
    %v886 = vpop.f32.mrb[0].mxu0
    %v887 = vpop.f32.mrb[0].mxu0
    %v888 = vadd.f32 0.0, %v887
    %v889 = vpop.f32.mrb[0].mxu0
    %890 = vdwg.mxu0
    %v891 = vadd.f32 %v495, %v734
    %v892 = vadd.f32 %v497, %v736
    %v893 = vadd.f32 %v598, %v837
    %v894 = vadd.f32 %v499, %v738
    %v895 = vadd.f32 %v501, %v740
    %v896 = vadd.f32 %v601, %v840
    %v897 = vadd.f32 %v505, %v744
    %v898 = vadd.f32 %v507, %v746
    %v899 = vadd.f32 %v606, %v845
    %v900 = vadd.f32 %v509, %v748
    %v901 = vadd.f32 %v511, %v750
    %v902 = vadd.f32 %v609, %v848
    %v903 = vadd.f32 %v515, %v754
    %v904 = vadd.f32 %v517, %v756
    %v905 = vadd.f32 %v614, %v853
    %v906 = vadd.f32 %v519, %v758
    %v907 = vadd.f32 %v521, %v760
    %v908 = vadd.f32 %v617, %v856
    %v909 = vadd.f32 %v525, %v764
    %v910 = vadd.f32 %v527, %v766
    %v911 = vadd.f32 %v622, %v861
    %v912 = vadd.f32 %v529, %v768
    %v913 = vadd.f32 %v531, %v770
    %v914 = vadd.f32 %v625, %v864
    %v915 = vadd.f32 %v535, %v774
    %v916 = vadd.f32 %v537, %v776
    %v917 = vadd.f32 %v630, %v869
    %v918 = vadd.f32 %v539, %v778
    %v919 = vadd.f32 %v541, %v780
    %v920 = vadd.f32 %v633, %v872
    %v921 = vadd.f32 %v545, %v784
    %v922 = vadd.f32 %v547, %v786
    %v923 = vadd.f32 %v638, %v877
    %v924 = vadd.f32 %v549, %v788
    %v925 = vadd.f32 %v551, %v790
    %v926 = vadd.f32 %v641, %v880
    %v927 = vadd.f32 %v555, %v794
    %v928 = vadd.f32 %v557, %v796
    %v929 = vadd.f32 %v646, %v885
    %v930 = vadd.f32 %v559, %v798
    %v931 = vadd.f32 %v561, %v800
    %v932 = vadd.f32 %v649, %v888
    %v933 = vld [vmem:[%s3] sm:$0x7]
    %v935 = vlaneseq
    %v936 = vshrl.u32 %v935, 7
    %v937 = vsub.s32 0, %v936
    %v938 = vrot.slane %v933, %v937
    %v939 = vlaneseq
    %v940 = vshrl.u32 %v939, 7
    %v941 = vsub.s32 1, %v940
    %v942 = vrot.slane %v933, %v941
    %v943 = vlaneseq
    %v944 = vshrl.u32 %v943, 7
    %v945 = vsub.s32 2, %v944
    %v946 = vrot.slane %v933, %v945
    %v950 = vadd.f32 %v891, %v938
    %v951 = vadd.f32 %v892, %v942
    %v952 = vadd.f32 %v893, %v946
    %v953 = vadd.f32 %v894, %v938
    %v954 = vadd.f32 %v895, %v942
    %v955 = vadd.f32 %v896, %v946
    %v956 = vadd.f32 %v897, %v938
    %v957 = vadd.f32 %v898, %v942
    %v958 = vadd.f32 %v899, %v946
    %v959 = vadd.f32 %v900, %v938
    %v960 = vadd.f32 %v901, %v942
    %v961 = vadd.f32 %v902, %v946
    %v962 = vadd.f32 %v903, %v938
    %v963 = vadd.f32 %v904, %v942
    %v964 = vadd.f32 %v905, %v946
    %v965 = vadd.f32 %v906, %v938
    %v966 = vadd.f32 %v907, %v942
    %v967 = vadd.f32 %v908, %v946
    %v968 = vadd.f32 %v909, %v938
    %v969 = vadd.f32 %v910, %v942
    %v970 = vadd.f32 %v911, %v946
    %v971 = vadd.f32 %v912, %v938
    %v972 = vadd.f32 %v913, %v942
    %v973 = vadd.f32 %v914, %v946
    %v974 = vadd.f32 %v915, %v938
    %v975 = vadd.f32 %v916, %v942
    %v976 = vadd.f32 %v917, %v946
    %v977 = vadd.f32 %v918, %v938
    %v978 = vadd.f32 %v919, %v942
    %v979 = vadd.f32 %v920, %v946
    %v980 = vadd.f32 %v921, %v938
    %v981 = vadd.f32 %v922, %v942
    %v982 = vadd.f32 %v923, %v946
    %v983 = vadd.f32 %v924, %v938
    %v984 = vadd.f32 %v925, %v942
    %v985 = vadd.f32 %v926, %v946
    %v986 = vadd.f32 %v927, %v938
    %v987 = vadd.f32 %v928, %v942
    %v988 = vadd.f32 %v929, %v946
    %v989 = vadd.f32 %v930, %v938
    %v990 = vadd.f32 %v931, %v942
    %v991 = vadd.f32 %v932, %v946
    %v992 = vmax.f32 %v950, 0.0
    %v993 = vmax.f32 %v951, 0.0
    %v994 = vmax.f32 %v952, 0.0
    %v995 = vmax.f32 %v953, 0.0
    %v996 = vmax.f32 %v954, 0.0
    %v997 = vmax.f32 %v955, 0.0
    %v998 = vmax.f32 %v956, 0.0
    %v999 = vmax.f32 %v957, 0.0
    %v1000 = vmax.f32 %v958, 0.0
    %v1001 = vmax.f32 %v959, 0.0
    %v1002 = vmax.f32 %v960, 0.0
    %v1003 = vmax.f32 %v961, 0.0
    %v1004 = vmax.f32 %v962, 0.0
    %v1005 = vmax.f32 %v963, 0.0
    %v1006 = vmax.f32 %v964, 0.0
    %v1007 = vmax.f32 %v965, 0.0
    %v1008 = vmax.f32 %v966, 0.0
    %v1009 = vmax.f32 %v967, 0.0
    %v1010 = vmax.f32 %v968, 0.0
    %v1011 = vmax.f32 %v969, 0.0
    %v1012 = vmax.f32 %v970, 0.0
    %v1013 = vmax.f32 %v971, 0.0
    %v1014 = vmax.f32 %v972, 0.0
    %v1015 = vmax.f32 %v973, 0.0
    %v1016 = vmax.f32 %v974, 0.0
    %v1017 = vmax.f32 %v975, 0.0
    %v1018 = vmax.f32 %v976, 0.0
    %v1019 = vmax.f32 %v977, 0.0
    %v1020 = vmax.f32 %v978, 0.0
    %v1021 = vmax.f32 %v979, 0.0
    %v1022 = vmax.f32 %v980, 0.0
    %v1023 = vmax.f32 %v981, 0.0
    %v1024 = vmax.f32 %v982, 0.0
    %v1025 = vmax.f32 %v983, 0.0
    %v1026 = vmax.f32 %v984, 0.0
    %v1027 = vmax.f32 %v985, 0.0
    %v1028 = vmax.f32 %v986, 0.0
    %v1029 = vmax.f32 %v987, 0.0
    %v1030 = vmax.f32 %v988, 0.0
    %v1031 = vmax.f32 %v989, 0.0
    %v1032 = vmax.f32 %v990, 0.0
    %v1033 = vmax.f32 %v991, 0.0
    %v1034 = vpack.c.bf16 %v992, %v992
    %v1035 = vpack.c.bf16 %v993, %v993
    %v1036 = vpack.c.bf16 %v994, %v994
    %v1037 = vpack.c.bf16 %v995, %v995
    %v1038 = vpack.c.bf16 %v996, %v996
    %v1039 = vpack.c.bf16 %v997, %v997
    %v1040 = vpack.c.bf16 %v998, %v998
    %v1041 = vpack.c.bf16 %v999, %v999
    %v1042 = vpack.c.bf16 %v1000, %v1000
    %v1043 = vpack.c.bf16 %v1001, %v1001
    %v1044 = vpack.c.bf16 %v1002, %v1002
    %v1045 = vpack.c.bf16 %v1003, %v1003
    %v1046 = vpack.c.bf16 %v1004, %v1004
    %v1047 = vpack.c.bf16 %v1005, %v1005
    %v1048 = vpack.c.bf16 %v1006, %v1006
    %v1049 = vpack.c.bf16 %v1007, %v1007
    %v1050 = vpack.c.bf16 %v1008, %v1008
    %v1051 = vpack.c.bf16 %v1009, %v1009
    %v1052 = vpack.c.bf16 %v1010, %v1010
    %v1053 = vpack.c.bf16 %v1011, %v1011
    %v1054 = vpack.c.bf16 %v1012, %v1012
    %v1055 = vpack.c.bf16 %v1013, %v1013
    %v1056 = vpack.c.bf16 %v1014, %v1014
    %v1057 = vpack.c.bf16 %v1015, %v1015
    %v1058 = vpack.c.bf16 %v1016, %v1016
    %v1059 = vpack.c.bf16 %v1017, %v1017
    %v1060 = vpack.c.bf16 %v1018, %v1018
    %v1061 = vpack.c.bf16 %v1019, %v1019
    %v1062 = vpack.c.bf16 %v1020, %v1020
    %v1063 = vpack.c.bf16 %v1021, %v1021
    %v1064 = vpack.c.bf16 %v1022, %v1022
    %v1065 = vpack.c.bf16 %v1023, %v1023
    %v1066 = vpack.c.bf16 %v1024, %v1024
    %v1067 = vpack.c.bf16 %v1025, %v1025
    %v1068 = vpack.c.bf16 %v1026, %v1026
    %v1069 = vpack.c.bf16 %v1027, %v1027
    %v1070 = vpack.c.bf16 %v1028, %v1028
    %v1071 = vpack.c.bf16 %v1029, %v1029
    %v1072 = vpack.c.bf16 %v1030, %v1030
    %v1073 = vpack.c.bf16 %v1031, %v1031
    %v1074 = vpack.c.bf16 %v1032, %v1032
    %v1075 = vpack.c.bf16 %v1033, %v1033
    %vm1076 = vcmask 1043456
    %v1079 = vsel %vm1076, %v1034, 4286644096
    %v1082 = vsel %vm1076, %v1037, 4286644096
    %v1085 = vsel %vm1076, %v1040, 4286644096
    %v1088 = vsel %vm1076, %v1043, 4286644096
    %v1091 = vsel %vm1076, %v1046, 4286644096
    %v1093 = vmax.bf16 %v1079, %v1091
    %v1095 = vsel %vm1076, %v1049, 4286644096
    %v1097 = vmax.bf16 %v1082, %v1095
    %v1099 = vsel %vm1076, %v1052, 4286644096
    %v1101 = vmax.bf16 %v1085, %v1099
    %v1103 = vsel %vm1076, %v1055, 4286644096
    %v1105 = vmax.bf16 %v1088, %v1103
    %v1107 = vsel %vm1076, %v1058, 4286644096
    %v1109 = vmax.bf16 %v1093, %v1107
    %v1111 = vsel %vm1076, %v1061, 4286644096
    %v1113 = vmax.bf16 %v1097, %v1111
    %v1115 = vsel %vm1076, %v1064, 4286644096
    %v1117 = vmax.bf16 %v1101, %v1115
    %v1119 = vsel %vm1076, %v1067, 4286644096
    %v1121 = vmax.bf16 %v1105, %v1119
    %v1123 = vsel %vm1076, %v1070, 4286644096
    %v1125 = vmax.bf16 %v1109, %v1123
    %v1127 = vsel %vm1076, %v1073, 4286644096
    %v1129 = vmax.bf16 %v1113, %v1127
    %v1130 = vmax.bf16 %v1125, %v1129
    %v1131 = vmax.bf16 %v1117, %v1121
    %v1132 = vmax.bf16 %v1130, %v1131
    %v1133 = vld [vmem:[#allocation8] sm:$0xf]
    %v1134 = vld [vmem:[#allocation8 + $0x4] sm:$0xf]
    %v1135 = vld [vmem:[#allocation8 + $0x8] sm:$0xf]
    %v1136 = vld [vmem:[#allocation8 + $0xc] sm:$0xf]
    %v1137 = vld [vmem:[#allocation8 + $0x10] sm:$0xf]
    %v1138 = vld [vmem:[#allocation8 + $0x14] sm:$0xf]
    %v1139 = vld [vmem:[#allocation8 + $0x18] sm:$0xf]
    %v1140 = vld [vmem:[#allocation8 + $0x1c] sm:$0xf]
    %v1141 = vld [vmem:[#allocation8 + $0x20] sm:$0xf]
    %v1142 = vld [vmem:[#allocation8 + $0x24] sm:$0xf]
    %v1143 = vld [vmem:[#allocation8 + $0x28] sm:$0xf]
    %v1144 = vld [vmem:[#allocation8 + $0x2c] sm:$0xf]
    %v1145 = vld [vmem:[#allocation8 + $0x30] sm:$0xf]
    %v1146 = vld [vmem:[#allocation8 + $0x34] sm:$0xf]
    %v1147 = vld [vmem:[#allocation8 + $0x38] sm:$0xf]
    %v1148 = vld [vmem:[#allocation8 + $0x3c] sm:$0xf]
    %v1163 = vunpack.c.l.b16 %v1035
    %v1164 = vunpack.c.l.b16 %v1038
    %v1165 = vunpack.c.l.b16 %v1041
    %v1166 = vunpack.c.l.b16 %v1044
    %v1167 = vunpack.c.l.b16 %v1047
    %v1168 = vunpack.c.l.b16 %v1050
    %v1169 = vunpack.c.l.b16 %v1053
    %v1170 = vunpack.c.l.b16 %v1056
    %v1171 = vunpack.c.l.b16 %v1059
    %v1172 = vunpack.c.l.b16 %v1062
    %v1173 = vunpack.c.l.b16 %v1065
    %v1174 = vunpack.c.l.b16 %v1068
    %v1175 = vunpack.c.l.b16 %v1071
    %v1176 = vunpack.c.l.b16 %v1074
    %v1177 = vld [vmem:[#allocation7] sm:$0xf]
    %v1178 = vld [vmem:[#allocation7 + $0x4] sm:$0xf]
    %v1179 = vld [vmem:[#allocation7 + $0x8] sm:$0xf]
    %v1180 = vld [vmem:[#allocation7 + $0xc] sm:$0xf]
    %v1181 = vld [vmem:[#allocation7 + $0x10] sm:$0xf]
    %v1182 = vld [vmem:[#allocation7 + $0x14] sm:$0xf]
    %v1183 = vld [vmem:[#allocation7 + $0x18] sm:$0xf]
    %v1184 = vld [vmem:[#allocation7 + $0x1c] sm:$0xf]
    %v1185 = vld [vmem:[#allocation7 + $0x20] sm:$0xf]
    %v1186 = vld [vmem:[#allocation7 + $0x24] sm:$0xf]
    %v1187 = vld [vmem:[#allocation7 + $0x28] sm:$0xf]
    %v1188 = vld [vmem:[#allocation7 + $0x2c] sm:$0xf]
    %v1189 = vld [vmem:[#allocation7 + $0x30] sm:$0xf]
    %v1190 = vld [vmem:[#allocation7 + $0x34] sm:$0xf]
    %v1191 = vld [vmem:[#allocation7 + $0x38] sm:$0xf]
    %v1192 = vld [vmem:[#allocation7 + $0x3c] sm:$0xf]
    %v1193 = vld [vmem:[#allocation7 + $0x40] sm:$0xf]
    %v1194 = vld [vmem:[#allocation7 + $0x44] sm:$0xf]
    %v1195 = vld [vmem:[#allocation7 + $0x48] sm:$0xf]
    %v1196 = vld [vmem:[#allocation7 + $0x4c] sm:$0xf]
    %v1197 = vld [vmem:[#allocation7 + $0x50] sm:$0xf]
    %v1198 = vld [vmem:[#allocation7 + $0x54] sm:$0xf]
    %v1199 = vld [vmem:[#allocation7 + $0x58] sm:$0xf]
    %v1200 = vld [vmem:[#allocation7 + $0x5c] sm:$0xf]
    %v1201 = vld [vmem:[#allocation7 + $0x60] sm:$0xf]
    %v1202 = vld [vmem:[#allocation7 + $0x64] sm:$0xf]
    %v1203 = vld [vmem:[#allocation7 + $0x68] sm:$0xf]
    %v1204 = vld [vmem:[#allocation7 + $0x6c] sm:$0xf]
    %v1205 = vld [vmem:[#allocation7 + $0x70] sm:$0xf]
    %v1206 = vld [vmem:[#allocation7 + $0x74] sm:$0xf]
    %v1207 = vld [vmem:[#allocation7 + $0x78] sm:$0xf]
    %v1208 = vld [vmem:[#allocation7 + $0x7c] sm:$0xf]
    %v1209 = vld [vmem:[#allocation7 + $0x80] sm:$0xf]
    %v1210 = vld [vmem:[#allocation7 + $0x84] sm:$0xf]
    %v1211 = vld [vmem:[#allocation7 + $0x88] sm:$0xf]
    %v1212 = vld [vmem:[#allocation7 + $0x8c] sm:$0xf]
    %v1213 = vld [vmem:[#allocation7 + $0x90] sm:$0xf]
    %v1214 = vld [vmem:[#allocation7 + $0x94] sm:$0xf]
    %v1215 = vld [vmem:[#allocation7 + $0x98] sm:$0xf]
    %v1216 = vld [vmem:[#allocation7 + $0x9c] sm:$0xf]
    %v1217 = vld [vmem:[#allocation7 + $0xa0] sm:$0xf]
    %v1218 = vld [vmem:[#allocation7 + $0xa4] sm:$0xf]
    %v1219 = vld [vmem:[#allocation7 + $0xa8] sm:$0xf]
    %v1220 = vld [vmem:[#allocation7 + $0xac] sm:$0xf]
    %v1221 = vld [vmem:[#allocation7 + $0xb0] sm:$0xf]
    %v1222 = vld [vmem:[#allocation7 + $0xb4] sm:$0xf]
    %v1223 = vld [vmem:[#allocation7 + $0xb8] sm:$0xf]
    %v1224 = vld [vmem:[#allocation7 + $0xbc] sm:$0xf]
    %v1225 = vld [vmem:[%s4] sm:$0x1]
    %v1227 = vlaneseq
    %v1228 = vshrl.u32 %v1227, 7
    %v1229 = vsub.s32 0, %v1228
    %v1230 = vrot.slane %v1225, %v1229
    %v1232 = vpack.c.b16 %v1164, %v1163
    %v1233 = vpack.c.b16 %v1165, %v1164
    %v1234 = vpack.c.b16 %v1166, %v1165
    %v1235 = vpack.c.b16 %v1167, %v1166
    %v1236 = vpack.c.b16 %v1168, %v1167
    %v1237 = vpack.c.b16 %v1169, %v1168
    %v1238 = vpack.c.b16 %v1170, %v1169
    %v1239 = vpack.c.b16 %v1171, %v1170
    %v1240 = vpack.c.b16 %v1172, %v1171
    %v1241 = vpack.c.b16 %v1173, %v1172
    %v1242 = vpack.c.b16 %v1174, %v1173
    %v1243 = vpack.c.b16 %v1175, %v1174
    %v1244 = vpack.c.b16 %v1176, %v1175
    %v1306 = vunpack.c.l.b16 %v1177
    %v1307 = vunpack.c.l.b16 %v1178
    %v1308 = vunpack.c.l.b16 %v1179
    %v1309 = vunpack.c.l.b16 %v1180
    %v1310 = vunpack.c.l.b16 %v1181
    %v1311 = vunpack.c.l.b16 %v1182
    %v1312 = vunpack.c.l.b16 %v1183
    %v1313 = vunpack.c.l.b16 %v1184
    %v1314 = vunpack.c.l.b16 %v1185
    %v1315 = vunpack.c.l.b16 %v1186
    %v1316 = vunpack.c.l.b16 %v1187
    %v1317 = vunpack.c.l.b16 %v1188
    %v1318 = vunpack.c.l.b16 %v1189
    %v1319 = vunpack.c.l.b16 %v1190
    %v1320 = vunpack.c.l.b16 %v1191
    %v1321 = vunpack.c.l.b16 %v1192
    %v1322 = vunpack.c.l.b16 %v1193
    %v1323 = vunpack.c.l.b16 %v1194
    %v1324 = vunpack.c.l.b16 %v1195
    %v1325 = vunpack.c.l.b16 %v1196
    %v1326 = vunpack.c.l.b16 %v1197
    %v1327 = vunpack.c.l.b16 %v1198
    %v1328 = vunpack.c.l.b16 %v1199
    %v1329 = vunpack.c.l.b16 %v1200
    %v1330 = vunpack.c.l.b16 %v1201
    %v1331 = vunpack.c.l.b16 %v1202
    %v1332 = vunpack.c.l.b16 %v1203
    %v1333 = vunpack.c.l.b16 %v1204
    %v1334 = vunpack.c.l.b16 %v1205
    %v1335 = vunpack.c.l.b16 %v1206
    %v1336 = vunpack.c.l.b16 %v1207
    %v1337 = vunpack.c.l.b16 %v1208
    %v1338 = vunpack.c.l.b16 %v1209
    %v1339 = vunpack.c.l.b16 %v1210
    %v1340 = vunpack.c.l.b16 %v1211
    %v1341 = vunpack.c.l.b16 %v1212
    %v1342 = vunpack.c.l.b16 %v1213
    %v1343 = vunpack.c.l.b16 %v1214
    %v1344 = vunpack.c.l.b16 %v1215
    %v1345 = vunpack.c.l.b16 %v1216
    %v1346 = vunpack.c.l.b16 %v1217
    %v1347 = vunpack.c.l.b16 %v1218
    %v1348 = vunpack.c.l.b16 %v1219
    %v1349 = vunpack.c.l.b16 %v1220
    %v1350 = vunpack.c.l.b16 %v1221
    %v1351 = vunpack.c.l.b16 %v1222
    %v1352 = vunpack.c.l.b16 %v1223
    %v1353 = vunpack.c.l.b16 %v1224
    %v1354 = vpack.c.b16 %v1307, %v1306
    %v1355 = vpack.c.b16 %v1309, %v1308
    %v1356 = vpack.c.b16 %v1311, %v1310
    %v1357 = vpack.c.b16 %v1313, %v1312
    %v1358 = vpack.c.b16 %v1315, %v1314
    %v1359 = vpack.c.b16 %v1317, %v1316
    %v1360 = vpack.c.b16 %v1319, %v1318
    %v1361 = vpack.c.b16 %v1321, %v1320
    %v1362 = vpack.c.b16 %v1323, %v1322
    %v1363 = vpack.c.b16 %v1325, %v1324
    %v1364 = vpack.c.b16 %v1327, %v1326
    %v1365 = vpack.c.b16 %v1329, %v1328
    %v1366 = vpack.c.b16 %v1331, %v1330
    %v1367 = vpack.c.b16 %v1333, %v1332
    %v1368 = vpack.c.b16 %v1335, %v1334
    %v1369 = vpack.c.b16 %v1337, %v1336
    %v1370 = vpack.c.b16 %v1339, %v1338
    %v1371 = vpack.c.b16 %v1341, %v1340
    %v1372 = vpack.c.b16 %v1343, %v1342
    %v1373 = vpack.c.b16 %v1345, %v1344
    %v1374 = vpack.c.b16 %v1347, %v1346
    %v1375 = vpack.c.b16 %v1349, %v1348
    %v1376 = vpack.c.b16 %v1351, %v1350
    %v1377 = vpack.c.b16 %v1353, %v1352
    %1402 = vmatprep.subr.bf16.mxu0 0
    %1403 = vmatpush1.bf16.msra.mxu0 %v1354
    %1404 = vmatprep.subr.bf16.mxu0 0
    %1405 = vmatpush1.bf16.msra.mxu0 %v1355
    %1406 = vmatprep.subr.bf16.mxu0 0
    %1407 = vmatpush1.bf16.msra.mxu0 %v1356
    %1408 = vmatprep.subr.bf16.mxu0 0
    %1409 = vmatpush1.bf16.msra.mxu0 %v1357
    %1410 = vmatprep.subr.bf16.mxu0 0
    %1411 = vmatpush1.bf16.msra.mxu0 %v1358
    %1412 = vmatprep.subr.bf16.mxu0 0
    %1413 = vmatpush1.bf16.msra.mxu0 %v1359
    %1414 = vmatprep.subr.bf16.mxu0 0
    %1415 = vmatpush1.bf16.msra.mxu0 %v1360
    %1416 = vmatprep.subr.bf16.mxu0 0
    %1417 = vmatpush1.bf16.msra.mxu0 %v1361
    %1418 = vmatprep.subr.bf16.mxu0 0
    %1419 = vmatpush1.bf16.msra.mxu0 %v1362
    %1420 = vmatprep.subr.bf16.mxu0 0
    %1421 = vmatpush1.bf16.msra.mxu0 %v1363
    %1422 = vmatprep.subr.bf16.mxu0 0
    %1423 = vmatpush1.bf16.msra.mxu0 %v1364
    %1424 = vmatprep.subr.bf16.mxu0 0
    %1425 = vmatpush1.bf16.msra.mxu0 %v1365
    %1426 = vmatprep.subr.bf16.mxu0 0
    %1427 = vmatpush1.bf16.msra.mxu0 %v1366
    %1428 = vmatprep.subr.bf16.mxu0 0
    %1429 = vmatpush1.bf16.msra.mxu0 %v1367
    %1430 = vmatprep.subr.bf16.mxu0 0
    %1431 = vmatpush1.bf16.msra.mxu0 %v1368
    %1432 = vmatprep.subr.bf16.mxu0 0
    %1433 = vmatpush1.bf16.msra.mxu0 %v1369
    %1434 = vmatprep.mubr.bf16.mxu0 %v1233
    %1435 = vmatmul.mubr.bf16.gmra.mrb[0].mxu0 %v1232
    %v1436 = vpop.f32.mrb[0].mxu0
    %v1437 = vadd.f32 %v1230, %v1436
    %v1438 = vpop.f32.mrb[0].mxu0
    %v1439 = vpop.f32.mrb[0].mxu0
    %v1440 = vadd.f32 %v1230, %v1439
    %v1441 = vpop.f32.mrb[0].mxu0
    %1442 = vmatprep.mubr.bf16.mxu0 %v1235
    %1443 = vmatmul.mubr.bf16.gmra.mrb[0].mxu0 %v1234
    %v1444 = vpop.f32.mrb[0].mxu0
    %v1445 = vadd.f32 %v1230, %v1444
    %v1446 = vpop.f32.mrb[0].mxu0
    %v1447 = vpop.f32.mrb[0].mxu0
    %v1448 = vadd.f32 %v1230, %v1447
    %v1449 = vpop.f32.mrb[0].mxu0
    %1450 = vmatprep.mubr.bf16.mxu0 %v1237
    %1451 = vmatmul.mubr.bf16.gmra.mrb[0].mxu0 %v1236
    %v1452 = vpop.f32.mrb[0].mxu0
    %v1453 = vadd.f32 %v1230, %v1452
    %v1454 = vpop.f32.mrb[0].mxu0
    %v1455 = vpop.f32.mrb[0].mxu0
    %v1456 = vadd.f32 %v1230, %v1455
    %v1457 = vpop.f32.mrb[0].mxu0
    %1458 = vmatprep.mubr.bf16.mxu0 %v1239
    %1459 = vmatmul.mubr.bf16.gmra.mrb[0].mxu0 %v1238
    %v1460 = vpop.f32.mrb[0].mxu0
    %v1461 = vadd.f32 %v1230, %v1460
    %v1462 = vpop.f32.mrb[0].mxu0
    %v1463 = vpop.f32.mrb[0].mxu0
    %v1464 = vadd.f32 %v1230, %v1463
    %v1465 = vpop.f32.mrb[0].mxu0
    %1466 = vmatprep.mubr.bf16.mxu0 %v1241
    %1467 = vmatmul.mubr.bf16.gmra.mrb[0].mxu0 %v1240
    %v1468 = vpop.f32.mrb[0].mxu0
    %v1469 = vadd.f32 %v1230, %v1468
    %v1470 = vpop.f32.mrb[0].mxu0
    %v1471 = vpop.f32.mrb[0].mxu0
    %v1472 = vadd.f32 %v1230, %v1471
    %v1473 = vpop.f32.mrb[0].mxu0
    %1474 = vmatprep.mubr.bf16.mxu0 %v1243
    %1475 = vmatmul.mubr.bf16.gmra.mrb[0].mxu0 %v1242
    %v1476 = vpop.f32.mrb[0].mxu0
    %v1477 = vadd.f32 %v1230, %v1476
    %v1478 = vpop.f32.mrb[0].mxu0
    %v1479 = vpop.f32.mrb[0].mxu0
    %v1480 = vadd.f32 %v1230, %v1479
    %v1481 = vpop.f32.mrb[0].mxu0
    %1482 = vdwg.mxu0
    %1483 = vmatprep.subr.bf16.mxu0 0
    %1484 = vmatpush1.bf16.msra.mxu0 %v1370
    %1485 = vmatprep.subr.bf16.mxu0 0
    %1486 = vmatpush1.bf16.msra.mxu0 %v1371
    %1487 = vmatprep.subr.bf16.mxu0 0
    %1488 = vmatpush1.bf16.msra.mxu0 %v1372
    %1489 = vmatprep.subr.bf16.mxu0 0
    %1490 = vmatpush1.bf16.msra.mxu0 %v1373
    %1491 = vmatprep.subr.bf16.mxu0 0
    %1492 = vmatpush1.bf16.msra.mxu0 %v1374
    %1493 = vmatprep.subr.bf16.mxu0 0
    %1494 = vmatpush1.bf16.msra.mxu0 %v1375
    %1495 = vmatprep.subr.bf16.mxu0 0
    %1496 = vmatpush1.bf16.msra.mxu0 %v1376
    %1497 = vmatprep.subr.bf16.mxu0 0
    %1498 = vmatpush1.bf16.msra.mxu0 %v1377
    %1499 = vmatprep.subr.bf16.mxu0 0
    %1500 = vmatpush1.bf16.msra.mxu0 0
    %1501 = vmatprep.subr.bf16.mxu0 0
    %1502 = vmatpush1.bf16.msra.mxu0 0
    %1503 = vmatprep.subr.bf16.mxu0 0
    %1504 = vmatpush1.bf16.msra.mxu0 0
    %1505 = vmatprep.subr.bf16.mxu0 0
    %1506 = vmatpush1.bf16.msra.mxu0 0
    %1507 = vmatprep.subr.bf16.mxu0 0
    %1508 = vmatpush1.bf16.msra.mxu0 0
    %1509 = vmatprep.subr.bf16.mxu0 0
    %1510 = vmatpush1.bf16.msra.mxu0 0
    %1511 = vmatprep.subr.bf16.mxu0 0
    %1512 = vmatpush1.bf16.msra.mxu0 0
    %1513 = vmatprep.subr.bf16.mxu0 0
    %1514 = vmatpush1.bf16.msra.mxu0 0
    %1515 = vmatprep.mubr.bf16.mxu0 0
    %1516 = vmatmul.mubr.bf16.gmra.mrb[0].mxu0 %v1234
    %v1517 = vpop.f32.mrb[0].mxu0
    %v1518 = vadd.f32 %v1437, %v1517
    %v1519 = vpop.f32.mrb[0].mxu0
    %v1520 = vpop.f32.mrb[0].mxu0
    %v1521 = vadd.f32 %v1440, %v1520
    %v1522 = vpop.f32.mrb[0].mxu0
    %1523 = vmatprep.mubr.bf16.mxu0 0
    %1524 = vmatmul.mubr.bf16.gmra.mrb[0].mxu0 %v1236
    %v1525 = vpop.f32.mrb[0].mxu0
    %v1526 = vadd.f32 %v1445, %v1525
    %v1527 = vpop.f32.mrb[0].mxu0
    %v1528 = vpop.f32.mrb[0].mxu0
    %v1529 = vadd.f32 %v1448, %v1528
    %v1530 = vpop.f32.mrb[0].mxu0
    %1531 = vmatprep.mubr.bf16.mxu0 0
    %1532 = vmatmul.mubr.bf16.gmra.mrb[0].mxu0 %v1238
    %v1533 = vpop.f32.mrb[0].mxu0
    %v1534 = vadd.f32 %v1453, %v1533
    %v1535 = vpop.f32.mrb[0].mxu0
    %v1536 = vpop.f32.mrb[0].mxu0
    %v1537 = vadd.f32 %v1456, %v1536
    %v1538 = vpop.f32.mrb[0].mxu0
    %1539 = vmatprep.mubr.bf16.mxu0 0
    %1540 = vmatmul.mubr.bf16.gmra.mrb[0].mxu0 %v1240
    %v1541 = vpop.f32.mrb[0].mxu0
    %v1542 = vadd.f32 %v1461, %v1541
    %v1543 = vpop.f32.mrb[0].mxu0
    %v1544 = vpop.f32.mrb[0].mxu0
    %v1545 = vadd.f32 %v1464, %v1544
    %v1546 = vpop.f32.mrb[0].mxu0
    %1547 = vmatprep.mubr.bf16.mxu0 0
    %1548 = vmatmul.mubr.bf16.gmra.mrb[0].mxu0 %v1242
    %v1549 = vpop.f32.mrb[0].mxu0
    %v1550 = vadd.f32 %v1469, %v1549
    %v1551 = vpop.f32.mrb[0].mxu0
    %v1552 = vpop.f32.mrb[0].mxu0
    %v1553 = vadd.f32 %v1472, %v1552
    %v1554 = vpop.f32.mrb[0].mxu0
    %1555 = vmatprep.mubr.bf16.mxu0 0
    %1556 = vmatmul.mubr.bf16.gmra.mrb[0].mxu0 %v1244
    %v1557 = vpop.f32.mrb[0].mxu0
    %v1558 = vadd.f32 %v1477, %v1557
    %v1559 = vpop.f32.mrb[0].mxu0
    %v1560 = vpop.f32.mrb[0].mxu0
    %v1561 = vadd.f32 %v1480, %v1560
    %v1562 = vpop.f32.mrb[0].mxu0
    %1563 = vdwg.mxu0
    %v1564 = vmax.f32 %v1518, 0.0
    %v1565 = vmax.f32 %v1521, 0.0
    %v1566 = vmax.f32 %v1526, 0.0
    %v1567 = vmax.f32 %v1529, 0.0
    %v1568 = vmax.f32 %v1534, 0.0
    %v1569 = vmax.f32 %v1537, 0.0
    %v1570 = vmax.f32 %v1542, 0.0
    %v1571 = vmax.f32 %v1545, 0.0
    %v1572 = vmax.f32 %v1550, 0.0
    %v1573 = vmax.f32 %v1553, 0.0
    %v1574 = vmax.f32 %v1558, 0.0
    %v1575 = vmax.f32 %v1561, 0.0
    %v1576 = vpack.c.bf16 %v1564, %v1564
    %v1577 = vpack.c.bf16 %v1565, %v1565
    %v1578 = vpack.c.bf16 %v1566, %v1566
    %v1579 = vpack.c.bf16 %v1567, %v1567
    %v1580 = vpack.c.bf16 %v1568, %v1568
    %v1581 = vpack.c.bf16 %v1569, %v1569
    %v1582 = vpack.c.bf16 %v1570, %v1570
    %v1583 = vpack.c.bf16 %v1571, %v1571
    %v1584 = vpack.c.bf16 %v1572, %v1572
    %v1585 = vpack.c.bf16 %v1573, %v1573
    %v1586 = vpack.c.bf16 %v1574, %v1574
    %v1587 = vpack.c.bf16 %v1575, %v1575
    %v1589 = vsel %vm1076, %v1576, 4286644096
    %v1592 = vsel %vm1076, %v1577, 4286644096
    %v1595 = vsel %vm1076, %v1578, 4286644096
    %v1598 = vsel %vm1076, %v1579, 4286644096
    %v1601 = vsel %vm1076, %v1580, 4286644096
    %v1603 = vmax.bf16 %v1589, %v1601
    %v1605 = vsel %vm1076, %v1581, 4286644096
    %v1607 = vmax.bf16 %v1592, %v1605
    %v1609 = vsel %vm1076, %v1582, 4286644096
    %v1611 = vmax.bf16 %v1595, %v1609
    %v1613 = vsel %vm1076, %v1583, 4286644096
    %v1615 = vmax.bf16 %v1598, %v1613
    %v1617 = vsel %vm1076, %v1584, 4286644096
    %v1619 = vmax.bf16 %v1603, %v1617
    %v1621 = vsel %vm1076, %v1585, 4286644096
    %v1623 = vmax.bf16 %v1607, %v1621
    %v1625 = vsel %vm1076, %v1586, 4286644096
    %v1627 = vmax.bf16 %v1611, %v1625
    %v1629 = vsel %vm1076, %v1587, 4286644096
    %v1631 = vmax.bf16 %v1615, %v1629
    %v1632 = vmax.bf16 %v1619, %v1623
    %v1633 = vmax.bf16 %v1627, %v1631
    %v1634 = vmax.bf16 %v1632, %v1633
    %s1635 = scalar_lea.vmem [#allocation8], 64
    %v1636 = vld [vmem:[%s1635] sm:$0xf]
    %v1637 = vld [vmem:[%s1635 + $0x4] sm:$0xf]
    %v1638 = vld [vmem:[%s1635 + $0x8] sm:$0xf]
    %v1639 = vld [vmem:[%s1635 + $0xc] sm:$0xf]
    %v1640 = vld [vmem:[%s1635 + $0x10] sm:$0xf]
    %v1641 = vld [vmem:[%s1635 + $0x14] sm:$0xf]
    %v1642 = vld [vmem:[%s1635 + $0x18] sm:$0xf]
    %v1643 = vld [vmem:[%s1635 + $0x1c] sm:$0xf]
    %v1644 = vld [vmem:[%s1635 + $0x20] sm:$0xf]
    %v1645 = vld [vmem:[%s1635 + $0x24] sm:$0xf]
    %v1646 = vld [vmem:[%s1635 + $0x28] sm:$0xf]
    %v1647 = vld [vmem:[%s1635 + $0x2c] sm:$0xf]
    %v1648 = vld [vmem:[%s1635 + $0x30] sm:$0xf]
    %v1649 = vld [vmem:[%s1635 + $0x34] sm:$0xf]
    %v1650 = vld [vmem:[%s1635 + $0x38] sm:$0xf]
    %v1651 = vld [vmem:[%s1635 + $0x3c] sm:$0xf]
    %v1668 = vunpack.c.l.b16 %v1636
    %v1669 = vunpack.c.l.b16 %v1637
    %v1670 = vunpack.c.l.b16 %v1638
    %v1671 = vunpack.c.l.b16 %v1639
    %v1672 = vunpack.c.l.b16 %v1640
    %v1673 = vunpack.c.l.b16 %v1641
    %v1674 = vunpack.c.l.b16 %v1642
    %v1675 = vunpack.c.l.b16 %v1643
    %v1676 = vunpack.c.l.b16 %v1644
    %v1677 = vunpack.c.l.b16 %v1645
    %v1678 = vunpack.c.l.b16 %v1646
    %v1679 = vunpack.c.l.b16 %v1647
    %v1680 = vunpack.c.l.b16 %v1648
    %v1681 = vunpack.c.l.b16 %v1649
    %v1682 = vunpack.c.l.b16 %v1650
    %v1683 = vunpack.c.l.b16 %v1651
    %v1684 = vpack.c.b16 %v1669, %v1668
    %v1685 = vpack.c.b16 %v1671, %v1670
    %v1686 = vpack.c.b16 %v1673, %v1672
    %v1687 = vpack.c.b16 %v1675, %v1674
    %v1688 = vpack.c.b16 %v1677, %v1676
    %v1689 = vpack.c.b16 %v1679, %v1678
    %v1690 = vpack.c.b16 %v1681, %v1680
    %v1691 = vpack.c.b16 %v1683, %v1682
    %1700 = vmatprep.subr.bf16.mxu0 0
    %1701 = vmatpush1.bf16.msra.mxu0 %v1684
    %1702 = vmatprep.subr.bf16.mxu0 0
    %1703 = vmatpush1.bf16.msra.mxu0 %v1685
    %1704 = vmatprep.subr.bf16.mxu0 0
    %1705 = vmatpush1.bf16.msra.mxu0 %v1686
    %1706 = vmatprep.subr.bf16.mxu0 0
    %1707 = vmatpush1.bf16.msra.mxu0 %v1687
    %1708 = vmatprep.subr.bf16.mxu0 0
    %1709 = vmatpush1.bf16.msra.mxu0 %v1688
    %1710 = vmatprep.subr.bf16.mxu0 0
    %1711 = vmatpush1.bf16.msra.mxu0 %v1689
    %1712 = vmatprep.subr.bf16.mxu0 0
    %1713 = vmatpush1.bf16.msra.mxu0 %v1690
    %1714 = vmatprep.subr.bf16.mxu0 0
    %1715 = vmatpush1.bf16.msra.mxu0 %v1691
    %1716 = vmatprep.subr.bf16.mxu0 0
    %1717 = vmatpush1.bf16.msra.mxu0 0
    %1718 = vmatprep.subr.bf16.mxu0 0
    %1719 = vmatpush1.bf16.msra.mxu0 0
    %1720 = vmatprep.subr.bf16.mxu0 0
    %1721 = vmatpush1.bf16.msra.mxu0 0
    %1722 = vmatprep.subr.bf16.mxu0 0
    %1723 = vmatpush1.bf16.msra.mxu0 0
    %1724 = vmatprep.subr.bf16.mxu0 0
    %1725 = vmatpush1.bf16.msra.mxu0 0
    %1726 = vmatprep.subr.bf16.mxu0 0
    %1727 = vmatpush1.bf16.msra.mxu0 0
    %1728 = vmatprep.subr.bf16.mxu0 0
    %1729 = vmatpush1.bf16.msra.mxu0 0
    %1730 = vmatprep.subr.bf16.mxu0 0
    %1731 = vmatpush1.bf16.msra.mxu0 0
    %1732 = vmatprep.mubr.bf16.mxu0 0
    %1733 = vmatmul.mubr.bf16.gmra.mrb[0].mxu0 %v1634
    %v1734 = vpop.f32.mrb[0].mxu0
    %v1735 = vadd.f32 0.0, %v1734
    %v1736 = vpop.f32.mrb[0].mxu0
    %v1737 = vpop.f32.mrb[0].mxu0
    %v1738 = vpop.f32.mrb[0].mxu0
    %1739 = vdwg.mxu0
    %v1756 = vunpack.c.l.b16 %v1133
    %v1757 = vunpack.c.l.b16 %v1134
    %v1758 = vunpack.c.l.b16 %v1135
    %v1759 = vunpack.c.l.b16 %v1136
    %v1760 = vunpack.c.l.b16 %v1137
    %v1761 = vunpack.c.l.b16 %v1138
    %v1762 = vunpack.c.l.b16 %v1139
    %v1763 = vunpack.c.l.b16 %v1140
    %v1764 = vunpack.c.l.b16 %v1141
    %v1765 = vunpack.c.l.b16 %v1142
    %v1766 = vunpack.c.l.b16 %v1143
    %v1767 = vunpack.c.l.b16 %v1144
    %v1768 = vunpack.c.l.b16 %v1145
    %v1769 = vunpack.c.l.b16 %v1146
    %v1770 = vunpack.c.l.b16 %v1147
    %v1771 = vunpack.c.l.b16 %v1148
    %v1772 = vpack.c.b16 %v1757, %v1756
    %v1773 = vpack.c.b16 %v1759, %v1758
    %v1774 = vpack.c.b16 %v1761, %v1760
    %v1775 = vpack.c.b16 %v1763, %v1762
    %v1776 = vpack.c.b16 %v1765, %v1764
    %v1777 = vpack.c.b16 %v1767, %v1766
    %v1778 = vpack.c.b16 %v1769, %v1768
    %v1779 = vpack.c.b16 %v1771, %v1770
    %1788 = vmatprep.subr.bf16.mxu0 0
    %1789 = vmatpush1.bf16.msra.mxu0 %v1772
    %1790 = vmatprep.subr.bf16.mxu0 0
    %1791 = vmatpush1.bf16.msra.mxu0 %v1773
    %1792 = vmatprep.subr.bf16.mxu0 0
    %1793 = vmatpush1.bf16.msra.mxu0 %v1774
    %1794 = vmatprep.subr.bf16.mxu0 0
    %1795 = vmatpush1.bf16.msra.mxu0 %v1775
    %1796 = vmatprep.subr.bf16.mxu0 0
    %1797 = vmatpush1.bf16.msra.mxu0 %v1776
    %1798 = vmatprep.subr.bf16.mxu0 0
    %1799 = vmatpush1.bf16.msra.mxu0 %v1777
    %1800 = vmatprep.subr.bf16.mxu0 0
    %1801 = vmatpush1.bf16.msra.mxu0 %v1778
    %1802 = vmatprep.subr.bf16.mxu0 0
    %1803 = vmatpush1.bf16.msra.mxu0 %v1779
    %1804 = vmatprep.subr.bf16.mxu0 0
    %1805 = vmatpush1.bf16.msra.mxu0 0
    %1806 = vmatprep.subr.bf16.mxu0 0
    %1807 = vmatpush1.bf16.msra.mxu0 0
    %1808 = vmatprep.subr.bf16.mxu0 0
    %1809 = vmatpush1.bf16.msra.mxu0 0
    %1810 = vmatprep.subr.bf16.mxu0 0
    %1811 = vmatpush1.bf16.msra.mxu0 0
    %1812 = vmatprep.subr.bf16.mxu0 0
    %1813 = vmatpush1.bf16.msra.mxu0 0
    %1814 = vmatprep.subr.bf16.mxu0 0
    %1815 = vmatpush1.bf16.msra.mxu0 0
    %1816 = vmatprep.subr.bf16.mxu0 0
    %1817 = vmatpush1.bf16.msra.mxu0 0
    %1818 = vmatprep.subr.bf16.mxu0 0
    %1819 = vmatpush1.bf16.msra.mxu0 0
    %1820 = vmatprep.mubr.bf16.mxu0 0
    %1821 = vmatmul.mubr.bf16.gmra.mrb[0].mxu0 %v1132
    %v1822 = vpop.f32.mrb[0].mxu0
    %v1823 = vadd.f32 %v1735, %v1822
    %v1824 = vpop.f32.mrb[0].mxu0
    %v1825 = vpop.f32.mrb[0].mxu0
    %v1826 = vpop.f32.mrb[0].mxu0
    %1827 = vdwg.mxu0
    %v1842 = vunpack.c.l.b16 %v1036
    %v1843 = vunpack.c.l.b16 %v1039
    %v1844 = vunpack.c.l.b16 %v1042
    %v1845 = vunpack.c.l.b16 %v1045
    %v1846 = vunpack.c.l.b16 %v1048
    %v1847 = vunpack.c.l.b16 %v1051
    %v1848 = vunpack.c.l.b16 %v1054
    %v1849 = vunpack.c.l.b16 %v1057
    %v1850 = vunpack.c.l.b16 %v1060
    %v1851 = vunpack.c.l.b16 %v1063
    %v1852 = vunpack.c.l.b16 %v1066
    %v1853 = vunpack.c.l.b16 %v1069
    %v1854 = vunpack.c.l.b16 %v1072
    %v1855 = vunpack.c.l.b16 %v1075
    %s1856 = scalar_lea.vmem [#allocation7], 192
    %v1857 = vld [vmem:[%s1856] sm:$0xf]
    %v1858 = vld [vmem:[%s1856 + $0x4] sm:$0xf]
    %v1859 = vld [vmem:[%s1856 + $0x8] sm:$0xf]
    %v1860 = vld [vmem:[%s1856 + $0xc] sm:$0xf]
    %v1861 = vld [vmem:[%s1856 + $0x10] sm:$0xf]
    %v1862 = vld [vmem:[%s1856 + $0x14] sm:$0xf]
    %v1863 = vld [vmem:[%s1856 + $0x18] sm:$0xf]
    %v1864 = vld [vmem:[%s1856 + $0x1c] sm:$0xf]
    %v1865 = vld [vmem:[%s1856 + $0x20] sm:$0xf]
    %v1866 = vld [vmem:[%s1856 + $0x24] sm:$0xf]
    %v1867 = vld [vmem:[%s1856 + $0x28] sm:$0xf]
    %v1868 = vld [vmem:[%s1856 + $0x2c] sm:$0xf]
    %v1869 = vld [vmem:[%s1856 + $0x30] sm:$0xf]
    %v1870 = vld [vmem:[%s1856 + $0x34] sm:$0xf]
    %v1871 = vld [vmem:[%s1856 + $0x38] sm:$0xf]
    %v1872 = vld [vmem:[%s1856 + $0x3c] sm:$0xf]
    %v1873 = vld [vmem:[%s1856 + $0x40] sm:$0xf]
    %v1874 = vld [vmem:[%s1856 + $0x44] sm:$0xf]
    %v1875 = vld [vmem:[%s1856 + $0x48] sm:$0xf]
    %v1876 = vld [vmem:[%s1856 + $0x4c] sm:$0xf]
    %v1877 = vld [vmem:[%s1856 + $0x50] sm:$0xf]
    %v1878 = vld [vmem:[%s1856 + $0x54] sm:$0xf]
    %v1879 = vld [vmem:[%s1856 + $0x58] sm:$0xf]
    %v1880 = vld [vmem:[%s1856 + $0x5c] sm:$0xf]
    %v1881 = vld [vmem:[%s1856 + $0x60] sm:$0xf]
    %v1882 = vld [vmem:[%s1856 + $0x64] sm:$0xf]
    %v1883 = vld [vmem:[%s1856 + $0x68] sm:$0xf]
    %v1884 = vld [vmem:[%s1856 + $0x6c] sm:$0xf]
    %v1885 = vld [vmem:[%s1856 + $0x70] sm:$0xf]
    %v1886 = vld [vmem:[%s1856 + $0x74] sm:$0xf]
    %v1887 = vld [vmem:[%s1856 + $0x78] sm:$0xf]
    %v1888 = vld [vmem:[%s1856 + $0x7c] sm:$0xf]
    %v1889 = vld [vmem:[%s1856 + $0x80] sm:$0xf]
    %v1890 = vld [vmem:[%s1856 + $0x84] sm:$0xf]
    %v1891 = vld [vmem:[%s1856 + $0x88] sm:$0xf]
    %v1892 = vld [vmem:[%s1856 + $0x8c] sm:$0xf]
    %v1893 = vld [vmem:[%s1856 + $0x90] sm:$0xf]
    %v1894 = vld [vmem:[%s1856 + $0x94] sm:$0xf]
    %v1895 = vld [vmem:[%s1856 + $0x98] sm:$0xf]
    %v1896 = vld [vmem:[%s1856 + $0x9c] sm:$0xf]
    %v1897 = vld [vmem:[%s1856 + $0xa0] sm:$0xf]
    %v1898 = vld [vmem:[%s1856 + $0xa4] sm:$0xf]
    %v1899 = vld [vmem:[%s1856 + $0xa8] sm:$0xf]
    %v1900 = vld [vmem:[%s1856 + $0xac] sm:$0xf]
    %v1901 = vld [vmem:[%s1856 + $0xb0] sm:$0xf]
    %v1902 = vld [vmem:[%s1856 + $0xb4] sm:$0xf]
    %v1903 = vld [vmem:[%s1856 + $0xb8] sm:$0xf]
    %v1904 = vld [vmem:[%s1856 + $0xbc] sm:$0xf]
    %s1905 = scalar_lea.vmem %s4, 1
    %v1906 = vld [vmem:[%s1905] sm:$0x1]
    %v1908 = vlaneseq
    %v1909 = vshrl.u32 %v1908, 7
    %v1910 = vsub.s32 0, %v1909
    %v1911 = vrot.slane %v1906, %v1910
    %v1913 = vpack.c.b16 %v1843, %v1842
    %v1914 = vpack.c.b16 %v1844, %v1843
    %v1915 = vpack.c.b16 %v1845, %v1844
    %v1916 = vpack.c.b16 %v1846, %v1845
    %v1917 = vpack.c.b16 %v1847, %v1846
    %v1918 = vpack.c.b16 %v1848, %v1847
    %v1919 = vpack.c.b16 %v1849, %v1848
    %v1920 = vpack.c.b16 %v1850, %v1849
    %v1921 = vpack.c.b16 %v1851, %v1850
    %v1922 = vpack.c.b16 %v1852, %v1851
    %v1923 = vpack.c.b16 %v1853, %v1852
    %v1924 = vpack.c.b16 %v1854, %v1853
    %v1925 = vpack.c.b16 %v1855, %v1854
    %v1987 = vunpack.c.l.b16 %v1857
    %v1988 = vunpack.c.l.b16 %v1858
    %v1989 = vunpack.c.l.b16 %v1859
    %v1990 = vunpack.c.l.b16 %v1860
    %v1991 = vunpack.c.l.b16 %v1861
    %v1992 = vunpack.c.l.b16 %v1862
    %v1993 = vunpack.c.l.b16 %v1863
    %v1994 = vunpack.c.l.b16 %v1864
    %v1995 = vunpack.c.l.b16 %v1865
    %v1996 = vunpack.c.l.b16 %v1866
    %v1997 = vunpack.c.l.b16 %v1867
    %v1998 = vunpack.c.l.b16 %v1868
    %v1999 = vunpack.c.l.b16 %v1869
    %v2000 = vunpack.c.l.b16 %v1870
    %v2001 = vunpack.c.l.b16 %v1871
    %v2002 = vunpack.c.l.b16 %v1872
    %v2003 = vunpack.c.l.b16 %v1873
    %v2004 = vunpack.c.l.b16 %v1874
    %v2005 = vunpack.c.l.b16 %v1875
    %v2006 = vunpack.c.l.b16 %v1876
    %v2007 = vunpack.c.l.b16 %v1877
    %v2008 = vunpack.c.l.b16 %v1878
    %v2009 = vunpack.c.l.b16 %v1879
    %v2010 = vunpack.c.l.b16 %v1880
    %v2011 = vunpack.c.l.b16 %v1881
    %v2012 = vunpack.c.l.b16 %v1882
    %v2013 = vunpack.c.l.b16 %v1883
    %v2014 = vunpack.c.l.b16 %v1884
    %v2015 = vunpack.c.l.b16 %v1885
    %v2016 = vunpack.c.l.b16 %v1886
    %v2017 = vunpack.c.l.b16 %v1887
    %v2018 = vunpack.c.l.b16 %v1888
    %v2019 = vunpack.c.l.b16 %v1889
    %v2020 = vunpack.c.l.b16 %v1890
    %v2021 = vunpack.c.l.b16 %v1891
    %v2022 = vunpack.c.l.b16 %v1892
    %v2023 = vunpack.c.l.b16 %v1893
    %v2024 = vunpack.c.l.b16 %v1894
    %v2025 = vunpack.c.l.b16 %v1895
    %v2026 = vunpack.c.l.b16 %v1896
    %v2027 = vunpack.c.l.b16 %v1897
    %v2028 = vunpack.c.l.b16 %v1898
    %v2029 = vunpack.c.l.b16 %v1899
    %v2030 = vunpack.c.l.b16 %v1900
    %v2031 = vunpack.c.l.b16 %v1901
    %v2032 = vunpack.c.l.b16 %v1902
    %v2033 = vunpack.c.l.b16 %v1903
    %v2034 = vunpack.c.l.b16 %v1904
    %v2035 = vpack.c.b16 %v1988, %v1987
    %v2036 = vpack.c.b16 %v1990, %v1989
    %v2037 = vpack.c.b16 %v1992, %v1991
    %v2038 = vpack.c.b16 %v1994, %v1993
    %v2039 = vpack.c.b16 %v1996, %v1995
    %v2040 = vpack.c.b16 %v1998, %v1997
    %v2041 = vpack.c.b16 %v2000, %v1999
    %v2042 = vpack.c.b16 %v2002, %v2001
    %v2043 = vpack.c.b16 %v2004, %v2003
    %v2044 = vpack.c.b16 %v2006, %v2005
    %v2045 = vpack.c.b16 %v2008, %v2007
    %v2046 = vpack.c.b16 %v2010, %v2009
    %v2047 = vpack.c.b16 %v2012, %v2011
    %v2048 = vpack.c.b16 %v2014, %v2013
    %v2049 = vpack.c.b16 %v2016, %v2015
    %v2050 = vpack.c.b16 %v2018, %v2017
    %v2051 = vpack.c.b16 %v2020, %v2019
    %v2052 = vpack.c.b16 %v2022, %v2021
    %v2053 = vpack.c.b16 %v2024, %v2023
    %v2054 = vpack.c.b16 %v2026, %v2025
    %v2055 = vpack.c.b16 %v2028, %v2027
    %v2056 = vpack.c.b16 %v2030, %v2029
    %v2057 = vpack.c.b16 %v2032, %v2031
    %v2058 = vpack.c.b16 %v2034, %v2033
    %2083 = vmatprep.subr.bf16.mxu0 0
    %2084 = vmatpush1.bf16.msra.mxu0 %v2035
    %2085 = vmatprep.subr.bf16.mxu0 0
    %2086 = vmatpush1.bf16.msra.mxu0 %v2036
    %2087 = vmatprep.subr.bf16.mxu0 0
    %2088 = vmatpush1.bf16.msra.mxu0 %v2037
    %2089 = vmatprep.subr.bf16.mxu0 0
    %2090 = vmatpush1.bf16.msra.mxu0 %v2038
    %2091 = vmatprep.subr.bf16.mxu0 0
    %2092 = vmatpush1.bf16.msra.mxu0 %v2039
    %2093 = vmatprep.subr.bf16.mxu0 0
    %2094 = vmatpush1.bf16.msra.mxu0 %v2040
    %2095 = vmatprep.subr.bf16.mxu0 0
    %2096 = vmatpush1.bf16.msra.mxu0 %v2041
    %2097 = vmatprep.subr.bf16.mxu0 0
    %2098 = vmatpush1.bf16.msra.mxu0 %v2042
    %2099 = vmatprep.subr.bf16.mxu0 0
    %2100 = vmatpush1.bf16.msra.mxu0 %v2043
    %2101 = vmatprep.subr.bf16.mxu0 0
    %2102 = vmatpush1.bf16.msra.mxu0 %v2044
    %2103 = vmatprep.subr.bf16.mxu0 0
    %2104 = vmatpush1.bf16.msra.mxu0 %v2045
    %2105 = vmatprep.subr.bf16.mxu0 0
    %2106 = vmatpush1.bf16.msra.mxu0 %v2046
    %2107 = vmatprep.subr.bf16.mxu0 0
    %2108 = vmatpush1.bf16.msra.mxu0 %v2047
    %2109 = vmatprep.subr.bf16.mxu0 0
    %2110 = vmatpush1.bf16.msra.mxu0 %v2048
    %2111 = vmatprep.subr.bf16.mxu0 0
    %2112 = vmatpush1.bf16.msra.mxu0 %v2049
    %2113 = vmatprep.subr.bf16.mxu0 0
    %2114 = vmatpush1.bf16.msra.mxu0 %v2050
    %2115 = vmatprep.mubr.bf16.mxu0 %v1914
    %2116 = vmatmul.mubr.bf16.gmra.mrb[0].mxu0 %v1913
    %v2117 = vpop.f32.mrb[0].mxu0
    %v2118 = vadd.f32 %v1911, %v2117
    %v2119 = vpop.f32.mrb[0].mxu0
    %v2120 = vpop.f32.mrb[0].mxu0
    %v2121 = vadd.f32 %v1911, %v2120
    %v2122 = vpop.f32.mrb[0].mxu0
    %2123 = vmatprep.mubr.bf16.mxu0 %v1916
    %2124 = vmatmul.mubr.bf16.gmra.mrb[0].mxu0 %v1915
    %v2125 = vpop.f32.mrb[0].mxu0
    %v2126 = vadd.f32 %v1911, %v2125
    %v2127 = vpop.f32.mrb[0].mxu0
    %v2128 = vpop.f32.mrb[0].mxu0
    %v2129 = vadd.f32 %v1911, %v2128
    %v2130 = vpop.f32.mrb[0].mxu0
    %2131 = vmatprep.mubr.bf16.mxu0 %v1918
    %2132 = vmatmul.mubr.bf16.gmra.mrb[0].mxu0 %v1917
    %v2133 = vpop.f32.mrb[0].mxu0
    %v2134 = vadd.f32 %v1911, %v2133
    %v2135 = vpop.f32.mrb[0].mxu0
    %v2136 = vpop.f32.mrb[0].mxu0
    %v2137 = vadd.f32 %v1911, %v2136
    %v2138 = vpop.f32.mrb[0].mxu0
    %2139 = vmatprep.mubr.bf16.mxu0 %v1920
    %2140 = vmatmul.mubr.bf16.gmra.mrb[0].mxu0 %v1919
    %v2141 = vpop.f32.mrb[0].mxu0
    %v2142 = vadd.f32 %v1911, %v2141
    %v2143 = vpop.f32.mrb[0].mxu0
    %v2144 = vpop.f32.mrb[0].mxu0
    %v2145 = vadd.f32 %v1911, %v2144
    %v2146 = vpop.f32.mrb[0].mxu0
    %2147 = vmatprep.mubr.bf16.mxu0 %v1922
    %2148 = vmatmul.mubr.bf16.gmra.mrb[0].mxu0 %v1921
    %v2149 = vpop.f32.mrb[0].mxu0
    %v2150 = vadd.f32 %v1911, %v2149
    %v2151 = vpop.f32.mrb[0].mxu0
    %v2152 = vpop.f32.mrb[0].mxu0
    %v2153 = vadd.f32 %v1911, %v2152
    %v2154 = vpop.f32.mrb[0].mxu0
    %2155 = vmatprep.mubr.bf16.mxu0 %v1924
    %2156 = vmatmul.mubr.bf16.gmra.mrb[0].mxu0 %v1923
    %v2157 = vpop.f32.mrb[0].mxu0
    %v2158 = vadd.f32 %v1911, %v2157
    %v2159 = vpop.f32.mrb[0].mxu0
    %v2160 = vpop.f32.mrb[0].mxu0
    %v2161 = vadd.f32 %v1911, %v2160
    %v2162 = vpop.f32.mrb[0].mxu0
    %2163 = vdwg.mxu0
    %2164 = vmatprep.subr.bf16.mxu0 0
    %2165 = vmatpush1.bf16.msra.mxu0 %v2051
    %2166 = vmatprep.subr.bf16.mxu0 0
    %2167 = vmatpush1.bf16.msra.mxu0 %v2052
    %2168 = vmatprep.subr.bf16.mxu0 0
    %2169 = vmatpush1.bf16.msra.mxu0 %v2053
    %2170 = vmatprep.subr.bf16.mxu0 0
    %2171 = vmatpush1.bf16.msra.mxu0 %v2054
    %2172 = vmatprep.subr.bf16.mxu0 0
    %2173 = vmatpush1.bf16.msra.mxu0 %v2055
    %2174 = vmatprep.subr.bf16.mxu0 0
    %2175 = vmatpush1.bf16.msra.mxu0 %v2056
    %2176 = vmatprep.subr.bf16.mxu0 0
    %2177 = vmatpush1.bf16.msra.mxu0 %v2057
    %2178 = vmatprep.subr.bf16.mxu0 0
    %2179 = vmatpush1.bf16.msra.mxu0 %v2058
    %2180 = vmatprep.subr.bf16.mxu0 0
    %2181 = vmatpush1.bf16.msra.mxu0 0
    %2182 = vmatprep.subr.bf16.mxu0 0
    %2183 = vmatpush1.bf16.msra.mxu0 0
    %2184 = vmatprep.subr.bf16.mxu0 0
    %2185 = vmatpush1.bf16.msra.mxu0 0
    %2186 = vmatprep.subr.bf16.mxu0 0
    %2187 = vmatpush1.bf16.msra.mxu0 0
    %2188 = vmatprep.subr.bf16.mxu0 0
    %2189 = vmatpush1.bf16.msra.mxu0 0
    %2190 = vmatprep.subr.bf16.mxu0 0
    %2191 = vmatpush1.bf16.msra.mxu0 0
    %2192 = vmatprep.subr.bf16.mxu0 0
    %2193 = vmatpush1.bf16.msra.mxu0 0
    %2194 = vmatprep.subr.bf16.mxu0 0
    %2195 = vmatpush1.bf16.msra.mxu0 0
    %2196 = vmatprep.mubr.bf16.mxu0 0
    %2197 = vmatmul.mubr.bf16.gmra.mrb[0].mxu0 %v1915
    %v2198 = vpop.f32.mrb[0].mxu0
    %v2199 = vadd.f32 %v2118, %v2198
    %v2200 = vpop.f32.mrb[0].mxu0
    %v2201 = vpop.f32.mrb[0].mxu0
    %v2202 = vadd.f32 %v2121, %v2201
    %v2203 = vpop.f32.mrb[0].mxu0
    %2204 = vmatprep.mubr.bf16.mxu0 0
    %2205 = vmatmul.mubr.bf16.gmra.mrb[0].mxu0 %v1917
    %v2206 = vpop.f32.mrb[0].mxu0
    %v2207 = vadd.f32 %v2126, %v2206
    %v2208 = vpop.f32.mrb[0].mxu0
    %v2209 = vpop.f32.mrb[0].mxu0
    %v2210 = vadd.f32 %v2129, %v2209
    %v2211 = vpop.f32.mrb[0].mxu0
    %2212 = vmatprep.mubr.bf16.mxu0 0
    %2213 = vmatmul.mubr.bf16.gmra.mrb[0].mxu0 %v1919
    %v2214 = vpop.f32.mrb[0].mxu0
    %v2215 = vadd.f32 %v2134, %v2214
    %v2216 = vpop.f32.mrb[0].mxu0
    %v2217 = vpop.f32.mrb[0].mxu0
    %v2218 = vadd.f32 %v2137, %v2217
    %v2219 = vpop.f32.mrb[0].mxu0
    %2220 = vmatprep.mubr.bf16.mxu0 0
    %2221 = vmatmul.mubr.bf16.gmra.mrb[0].mxu0 %v1921
    %v2222 = vpop.f32.mrb[0].mxu0
    %v2223 = vadd.f32 %v2142, %v2222
    %v2224 = vpop.f32.mrb[0].mxu0
    %v2225 = vpop.f32.mrb[0].mxu0
    %v2226 = vadd.f32 %v2145, %v2225
    %v2227 = vpop.f32.mrb[0].mxu0
    %2228 = vmatprep.mubr.bf16.mxu0 0
    %2229 = vmatmul.mubr.bf16.gmra.mrb[0].mxu0 %v1923
    %v2230 = vpop.f32.mrb[0].mxu0
    %v2231 = vadd.f32 %v2150, %v2230
    %v2232 = vpop.f32.mrb[0].mxu0
    %v2233 = vpop.f32.mrb[0].mxu0
    %v2234 = vadd.f32 %v2153, %v2233
    %v2235 = vpop.f32.mrb[0].mxu0
    %2236 = vmatprep.mubr.bf16.mxu0 0
    %2237 = vmatmul.mubr.bf16.gmra.mrb[0].mxu0 %v1925
    %v2238 = vpop.f32.mrb[0].mxu0
    %v2239 = vadd.f32 %v2158, %v2238
    %v2240 = vpop.f32.mrb[0].mxu0
    %v2241 = vpop.f32.mrb[0].mxu0
    %v2242 = vadd.f32 %v2161, %v2241
    %v2243 = vpop.f32.mrb[0].mxu0
    %2244 = vdwg.mxu0
    %v2245 = vmax.f32 %v2199, 0.0
    %v2246 = vmax.f32 %v2202, 0.0
    %v2247 = vmax.f32 %v2207, 0.0
    %v2248 = vmax.f32 %v2210, 0.0
    %v2249 = vmax.f32 %v2215, 0.0
    %v2250 = vmax.f32 %v2218, 0.0
    %v2251 = vmax.f32 %v2223, 0.0
    %v2252 = vmax.f32 %v2226, 0.0
    %v2253 = vmax.f32 %v2231, 0.0
    %v2254 = vmax.f32 %v2234, 0.0
    %v2255 = vmax.f32 %v2239, 0.0
    %v2256 = vmax.f32 %v2242, 0.0
    %v2257 = vpack.c.bf16 %v2245, %v2245
    %v2258 = vpack.c.bf16 %v2246, %v2246
    %v2259 = vpack.c.bf16 %v2247, %v2247
    %v2260 = vpack.c.bf16 %v2248, %v2248
    %v2261 = vpack.c.bf16 %v2249, %v2249
    %v2262 = vpack.c.bf16 %v2250, %v2250
    %v2263 = vpack.c.bf16 %v2251, %v2251
    %v2264 = vpack.c.bf16 %v2252, %v2252
    %v2265 = vpack.c.bf16 %v2253, %v2253
    %v2266 = vpack.c.bf16 %v2254, %v2254
    %v2267 = vpack.c.bf16 %v2255, %v2255
    %v2268 = vpack.c.bf16 %v2256, %v2256
    %v2281 = vunpack.c.l.b16 %v2257
    %v2282 = vunpack.c.l.b16 %v2258
    %v2283 = vunpack.c.l.b16 %v2259
    %v2284 = vunpack.c.l.b16 %v2260
    %v2285 = vunpack.c.l.b16 %v2261
    %v2286 = vunpack.c.l.b16 %v2262
    %v2287 = vunpack.c.l.b16 %v2263
    %v2288 = vunpack.c.l.b16 %v2264
    %v2289 = vunpack.c.l.b16 %v2265
    %v2290 = vunpack.c.l.b16 %v2266
    %v2291 = vunpack.c.l.b16 %v2267
    %v2292 = vunpack.c.l.b16 %v2268
    %s2293 = scalar_lea.vmem [#allocation7], 384
    %v2294 = vld [vmem:[%s2293] sm:$0xf]
    %v2295 = vld [vmem:[%s2293 + $0x4] sm:$0xf]
    %v2296 = vld [vmem:[%s2293 + $0x8] sm:$0xf]
    %v2297 = vld [vmem:[%s2293 + $0xc] sm:$0xf]
    %v2298 = vld [vmem:[%s2293 + $0x10] sm:$0xf]
    %v2299 = vld [vmem:[%s2293 + $0x14] sm:$0xf]
    %v2300 = vld [vmem:[%s2293 + $0x18] sm:$0xf]
    %v2301 = vld [vmem:[%s2293 + $0x1c] sm:$0xf]
    %v2302 = vld [vmem:[%s2293 + $0x20] sm:$0xf]
    %v2303 = vld [vmem:[%s2293 + $0x24] sm:$0xf]
    %v2304 = vld [vmem:[%s2293 + $0x28] sm:$0xf]
    %v2305 = vld [vmem:[%s2293 + $0x2c] sm:$0xf]
    %v2306 = vld [vmem:[%s2293 + $0x30] sm:$0xf]
    %v2307 = vld [vmem:[%s2293 + $0x34] sm:$0xf]
    %v2308 = vld [vmem:[%s2293 + $0x38] sm:$0xf]
    %v2309 = vld [vmem:[%s2293 + $0x3c] sm:$0xf]
    %v2310 = vld [vmem:[%s2293 + $0x40] sm:$0xf]
    %v2311 = vld [vmem:[%s2293 + $0x44] sm:$0xf]
    %v2312 = vld [vmem:[%s2293 + $0x48] sm:$0xf]
    %v2313 = vld [vmem:[%s2293 + $0x4c] sm:$0xf]
    %v2314 = vld [vmem:[%s2293 + $0x50] sm:$0xf]
    %v2315 = vld [vmem:[%s2293 + $0x54] sm:$0xf]
    %v2316 = vld [vmem:[%s2293 + $0x58] sm:$0xf]
    %v2317 = vld [vmem:[%s2293 + $0x5c] sm:$0xf]
    %v2318 = vld [vmem:[%s2293 + $0x60] sm:$0xf]
    %v2319 = vld [vmem:[%s2293 + $0x64] sm:$0xf]
    %v2320 = vld [vmem:[%s2293 + $0x68] sm:$0xf]
    %v2321 = vld [vmem:[%s2293 + $0x6c] sm:$0xf]
    %v2322 = vld [vmem:[%s2293 + $0x70] sm:$0xf]
    %v2323 = vld [vmem:[%s2293 + $0x74] sm:$0xf]
    %v2324 = vld [vmem:[%s2293 + $0x78] sm:$0xf]
    %v2325 = vld [vmem:[%s2293 + $0x7c] sm:$0xf]
    %v2326 = vld [vmem:[%s2293 + $0x80] sm:$0xf]
    %v2327 = vld [vmem:[%s2293 + $0x84] sm:$0xf]
    %v2328 = vld [vmem:[%s2293 + $0x88] sm:$0xf]
    %v2329 = vld [vmem:[%s2293 + $0x8c] sm:$0xf]
    %v2330 = vld [vmem:[%s2293 + $0x90] sm:$0xf]
    %v2331 = vld [vmem:[%s2293 + $0x94] sm:$0xf]
    %v2332 = vld [vmem:[%s2293 + $0x98] sm:$0xf]
    %v2333 = vld [vmem:[%s2293 + $0x9c] sm:$0xf]
    %v2334 = vld [vmem:[%s2293 + $0xa0] sm:$0xf]
    %v2335 = vld [vmem:[%s2293 + $0xa4] sm:$0xf]
    %v2336 = vld [vmem:[%s2293 + $0xa8] sm:$0xf]
    %v2337 = vld [vmem:[%s2293 + $0xac] sm:$0xf]
    %v2338 = vld [vmem:[%s2293 + $0xb0] sm:$0xf]
    %v2339 = vld [vmem:[%s2293 + $0xb4] sm:$0xf]
    %v2340 = vld [vmem:[%s2293 + $0xb8] sm:$0xf]
    %v2341 = vld [vmem:[%s2293 + $0xbc] sm:$0xf]
    %s2342 = scalar_lea.vmem %s4, 2
    %v2343 = vld [vmem:[%s2342] sm:$0x1]
    %v2345 = vlaneseq
    %v2346 = vshrl.u32 %v2345, 7
    %v2347 = vsub.s32 0, %v2346
    %v2348 = vrot.slane %v2343, %v2347
    %v2350 = vpack.c.b16 %v2282, %v2281
    %v2351 = vpack.c.b16 %v2283, %v2282
    %v2352 = vpack.c.b16 %v2284, %v2283
    %v2353 = vpack.c.b16 %v2285, %v2284
    %v2354 = vpack.c.b16 %v2286, %v2285
    %v2355 = vpack.c.b16 %v2287, %v2286
    %v2356 = vpack.c.b16 %v2288, %v2287
    %v2357 = vpack.c.b16 %v2289, %v2288
    %v2358 = vpack.c.b16 %v2290, %v2289
    %v2359 = vpack.c.b16 %v2291, %v2290
    %v2360 = vpack.c.b16 %v2292, %v2291
    %v2420 = vunpack.c.l.b16 %v2294
    %v2421 = vunpack.c.l.b16 %v2295
    %v2422 = vunpack.c.l.b16 %v2296
    %v2423 = vunpack.c.l.b16 %v2297
    %v2424 = vunpack.c.l.b16 %v2298
    %v2425 = vunpack.c.l.b16 %v2299
    %v2426 = vunpack.c.l.b16 %v2300
    %v2427 = vunpack.c.l.b16 %v2301
    %v2428 = vunpack.c.l.b16 %v2302
    %v2429 = vunpack.c.l.b16 %v2303
    %v2430 = vunpack.c.l.b16 %v2304
    %v2431 = vunpack.c.l.b16 %v2305
    %v2432 = vunpack.c.l.b16 %v2306
    %v2433 = vunpack.c.l.b16 %v2307
    %v2434 = vunpack.c.l.b16 %v2308
    %v2435 = vunpack.c.l.b16 %v2309
    %v2436 = vunpack.c.l.b16 %v2310
    %v2437 = vunpack.c.l.b16 %v2311
    %v2438 = vunpack.c.l.b16 %v2312
    %v2439 = vunpack.c.l.b16 %v2313
    %v2440 = vunpack.c.l.b16 %v2314
    %v2441 = vunpack.c.l.b16 %v2315
    %v2442 = vunpack.c.l.b16 %v2316
    %v2443 = vunpack.c.l.b16 %v2317
    %v2444 = vunpack.c.l.b16 %v2318
    %v2445 = vunpack.c.l.b16 %v2319
    %v2446 = vunpack.c.l.b16 %v2320
    %v2447 = vunpack.c.l.b16 %v2321
    %v2448 = vunpack.c.l.b16 %v2322
    %v2449 = vunpack.c.l.b16 %v2323
    %v2450 = vunpack.c.l.b16 %v2324
    %v2451 = vunpack.c.l.b16 %v2325
    %v2452 = vunpack.c.l.b16 %v2326
    %v2453 = vunpack.c.l.b16 %v2327
    %v2454 = vunpack.c.l.b16 %v2328
    %v2455 = vunpack.c.l.b16 %v2329
    %v2456 = vunpack.c.l.b16 %v2330
    %v2457 = vunpack.c.l.b16 %v2331
    %v2458 = vunpack.c.l.b16 %v2332
    %v2459 = vunpack.c.l.b16 %v2333
    %v2460 = vunpack.c.l.b16 %v2334
    %v2461 = vunpack.c.l.b16 %v2335
    %v2462 = vunpack.c.l.b16 %v2336
    %v2463 = vunpack.c.l.b16 %v2337
    %v2464 = vunpack.c.l.b16 %v2338
    %v2465 = vunpack.c.l.b16 %v2339
    %v2466 = vunpack.c.l.b16 %v2340
    %v2467 = vunpack.c.l.b16 %v2341
    %v2468 = vpack.c.b16 %v2421, %v2420
    %v2469 = vpack.c.b16 %v2423, %v2422
    %v2470 = vpack.c.b16 %v2425, %v2424
    %v2471 = vpack.c.b16 %v2427, %v2426
    %v2472 = vpack.c.b16 %v2429, %v2428
    %v2473 = vpack.c.b16 %v2431, %v2430
    %v2474 = vpack.c.b16 %v2433, %v2432
    %v2475 = vpack.c.b16 %v2435, %v2434
    %v2476 = vpack.c.b16 %v2437, %v2436
    %v2477 = vpack.c.b16 %v2439, %v2438
    %v2478 = vpack.c.b16 %v2441, %v2440
    %v2479 = vpack.c.b16 %v2443, %v2442
    %v2480 = vpack.c.b16 %v2445, %v2444
    %v2481 = vpack.c.b16 %v2447, %v2446
    %v2482 = vpack.c.b16 %v2449, %v2448
    %v2483 = vpack.c.b16 %v2451, %v2450
    %v2484 = vpack.c.b16 %v2453, %v2452
    %v2485 = vpack.c.b16 %v2455, %v2454
    %v2486 = vpack.c.b16 %v2457, %v2456
    %v2487 = vpack.c.b16 %v2459, %v2458
    %v2488 = vpack.c.b16 %v2461, %v2460
    %v2489 = vpack.c.b16 %v2463, %v2462
    %v2490 = vpack.c.b16 %v2465, %v2464
    %v2491 = vpack.c.b16 %v2467, %v2466
    %2516 = vmatprep.subr.bf16.mxu0 0
    %2517 = vmatpush1.bf16.msra.mxu0 %v2468
    %2518 = vmatprep.subr.bf16.mxu0 0
    %2519 = vmatpush1.bf16.msra.mxu0 %v2469
    %2520 = vmatprep.subr.bf16.mxu0 0
    %2521 = vmatpush1.bf16.msra.mxu0 %v2470
    %2522 = vmatprep.subr.bf16.mxu0 0
    %2523 = vmatpush1.bf16.msra.mxu0 %v2471
    %2524 = vmatprep.subr.bf16.mxu0 0
    %2525 = vmatpush1.bf16.msra.mxu0 %v2472
    %2526 = vmatprep.subr.bf16.mxu0 0
    %2527 = vmatpush1.bf16.msra.mxu0 %v2473
    %2528 = vmatprep.subr.bf16.mxu0 0
    %2529 = vmatpush1.bf16.msra.mxu0 %v2474
    %2530 = vmatprep.subr.bf16.mxu0 0
    %2531 = vmatpush1.bf16.msra.mxu0 %v2475
    %2532 = vmatprep.subr.bf16.mxu0 0
    %2533 = vmatpush1.bf16.msra.mxu0 %v2476
    %2534 = vmatprep.subr.bf16.mxu0 0
    %2535 = vmatpush1.bf16.msra.mxu0 %v2477
    %2536 = vmatprep.subr.bf16.mxu0 0
    %2537 = vmatpush1.bf16.msra.mxu0 %v2478
    %2538 = vmatprep.subr.bf16.mxu0 0
    %2539 = vmatpush1.bf16.msra.mxu0 %v2479
    %2540 = vmatprep.subr.bf16.mxu0 0
    %2541 = vmatpush1.bf16.msra.mxu0 %v2480
    %2542 = vmatprep.subr.bf16.mxu0 0
    %2543 = vmatpush1.bf16.msra.mxu0 %v2481
    %2544 = vmatprep.subr.bf16.mxu0 0
    %2545 = vmatpush1.bf16.msra.mxu0 %v2482
    %2546 = vmatprep.subr.bf16.mxu0 0
    %2547 = vmatpush1.bf16.msra.mxu0 %v2483
    %2548 = vmatprep.mubr.bf16.mxu0 %v2351
    %2549 = vmatmul.mubr.bf16.gmra.mrb[0].mxu0 %v2350
    %v2550 = vpop.f32.mrb[0].mxu0
    %v2551 = vadd.f32 %v2348, %v2550
    %v2552 = vpop.f32.mrb[0].mxu0
    %v2553 = vpop.f32.mrb[0].mxu0
    %v2554 = vadd.f32 %v2348, %v2553
    %v2555 = vpop.f32.mrb[0].mxu0
    %2556 = vmatprep.mubr.bf16.mxu0 %v2353
    %2557 = vmatmul.mubr.bf16.gmra.mrb[0].mxu0 %v2352
    %v2558 = vpop.f32.mrb[0].mxu0
    %v2559 = vadd.f32 %v2348, %v2558
    %v2560 = vpop.f32.mrb[0].mxu0
    %v2561 = vpop.f32.mrb[0].mxu0
    %v2562 = vadd.f32 %v2348, %v2561
    %v2563 = vpop.f32.mrb[0].mxu0
    %2564 = vmatprep.mubr.bf16.mxu0 %v2355
    %2565 = vmatmul.mubr.bf16.gmra.mrb[0].mxu0 %v2354
    %v2566 = vpop.f32.mrb[0].mxu0
    %v2567 = vadd.f32 %v2348, %v2566
    %v2568 = vpop.f32.mrb[0].mxu0
    %v2569 = vpop.f32.mrb[0].mxu0
    %v2570 = vadd.f32 %v2348, %v2569
    %v2571 = vpop.f32.mrb[0].mxu0
    %2572 = vmatprep.mubr.bf16.mxu0 %v2357
    %2573 = vmatmul.mubr.bf16.gmra.mrb[0].mxu0 %v2356
    %v2574 = vpop.f32.mrb[0].mxu0
    %v2575 = vadd.f32 %v2348, %v2574
    %v2576 = vpop.f32.mrb[0].mxu0
    %v2577 = vpop.f32.mrb[0].mxu0
    %v2578 = vadd.f32 %v2348, %v2577
    %v2579 = vpop.f32.mrb[0].mxu0
    %2580 = vmatprep.mubr.bf16.mxu0 %v2359
    %2581 = vmatmul.mubr.bf16.gmra.mrb[0].mxu0 %v2358
    %v2582 = vpop.f32.mrb[0].mxu0
    %v2583 = vadd.f32 %v2348, %v2582
    %v2584 = vpop.f32.mrb[0].mxu0
    %v2585 = vpop.f32.mrb[0].mxu0
    %v2586 = vadd.f32 %v2348, %v2585
    %v2587 = vpop.f32.mrb[0].mxu0
    %2588 = vdwg.mxu0
    %2589 = vmatprep.subr.bf16.mxu0 0
    %2590 = vmatpush1.bf16.msra.mxu0 %v2484
    %2591 = vmatprep.subr.bf16.mxu0 0
    %2592 = vmatpush1.bf16.msra.mxu0 %v2485
    %2593 = vmatprep.subr.bf16.mxu0 0
    %2594 = vmatpush1.bf16.msra.mxu0 %v2486
    %2595 = vmatprep.subr.bf16.mxu0 0
    %2596 = vmatpush1.bf16.msra.mxu0 %v2487
    %2597 = vmatprep.subr.bf16.mxu0 0
    %2598 = vmatpush1.bf16.msra.mxu0 %v2488
    %2599 = vmatprep.subr.bf16.mxu0 0
    %2600 = vmatpush1.bf16.msra.mxu0 %v2489
    %2601 = vmatprep.subr.bf16.mxu0 0
    %2602 = vmatpush1.bf16.msra.mxu0 %v2490
    %2603 = vmatprep.subr.bf16.mxu0 0
    %2604 = vmatpush1.bf16.msra.mxu0 %v2491
    %2605 = vmatprep.subr.bf16.mxu0 0
    %2606 = vmatpush1.bf16.msra.mxu0 0
    %2607 = vmatprep.subr.bf16.mxu0 0
    %2608 = vmatpush1.bf16.msra.mxu0 0
    %2609 = vmatprep.subr.bf16.mxu0 0
    %2610 = vmatpush1.bf16.msra.mxu0 0
    %2611 = vmatprep.subr.bf16.mxu0 0
    %2612 = vmatpush1.bf16.msra.mxu0 0
    %2613 = vmatprep.subr.bf16.mxu0 0
    %2614 = vmatpush1.bf16.msra.mxu0 0
    %2615 = vmatprep.subr.bf16.mxu0 0
    %2616 = vmatpush1.bf16.msra.mxu0 0
    %2617 = vmatprep.subr.bf16.mxu0 0
    %2618 = vmatpush1.bf16.msra.mxu0 0
    %2619 = vmatprep.subr.bf16.mxu0 0
    %2620 = vmatpush1.bf16.msra.mxu0 0
    %2621 = vmatprep.mubr.bf16.mxu0 0
    %2622 = vmatmul.mubr.bf16.gmra.mrb[0].mxu0 %v2352
    %v2623 = vpop.f32.mrb[0].mxu0
    %v2624 = vadd.f32 %v2551, %v2623
    %v2625 = vpop.f32.mrb[0].mxu0
    %v2626 = vpop.f32.mrb[0].mxu0
    %v2627 = vadd.f32 %v2554, %v2626
    %v2628 = vpop.f32.mrb[0].mxu0
    %2629 = vmatprep.mubr.bf16.mxu0 0
    %2630 = vmatmul.mubr.bf16.gmra.mrb[0].mxu0 %v2354
    %v2631 = vpop.f32.mrb[0].mxu0
    %v2632 = vadd.f32 %v2559, %v2631
    %v2633 = vpop.f32.mrb[0].mxu0
    %v2634 = vpop.f32.mrb[0].mxu0
    %v2635 = vadd.f32 %v2562, %v2634
    %v2636 = vpop.f32.mrb[0].mxu0
    %2637 = vmatprep.mubr.bf16.mxu0 0
    %2638 = vmatmul.mubr.bf16.gmra.mrb[0].mxu0 %v2356
    %v2639 = vpop.f32.mrb[0].mxu0
    %v2640 = vadd.f32 %v2567, %v2639
    %v2641 = vpop.f32.mrb[0].mxu0
    %v2642 = vpop.f32.mrb[0].mxu0
    %v2643 = vadd.f32 %v2570, %v2642
    %v2644 = vpop.f32.mrb[0].mxu0
    %2645 = vmatprep.mubr.bf16.mxu0 0
    %2646 = vmatmul.mubr.bf16.gmra.mrb[0].mxu0 %v2358
    %v2647 = vpop.f32.mrb[0].mxu0
    %v2648 = vadd.f32 %v2575, %v2647
    %v2649 = vpop.f32.mrb[0].mxu0
    %v2650 = vpop.f32.mrb[0].mxu0
    %v2651 = vadd.f32 %v2578, %v2650
    %v2652 = vpop.f32.mrb[0].mxu0
    %2653 = vmatprep.mubr.bf16.mxu0 0
    %2654 = vmatmul.mubr.bf16.gmra.mrb[0].mxu0 %v2360
    %v2655 = vpop.f32.mrb[0].mxu0
    %v2656 = vadd.f32 %v2583, %v2655
    %v2657 = vpop.f32.mrb[0].mxu0
    %v2658 = vpop.f32.mrb[0].mxu0
    %v2659 = vadd.f32 %v2586, %v2658
    %v2660 = vpop.f32.mrb[0].mxu0
    %2661 = vdwg.mxu0
    %v2662 = vmax.f32 %v2624, 0.0
    %v2663 = vmax.f32 %v2627, 0.0
    %v2664 = vmax.f32 %v2632, 0.0
    %v2665 = vmax.f32 %v2635, 0.0
    %v2666 = vmax.f32 %v2640, 0.0
    %v2667 = vmax.f32 %v2643, 0.0
    %v2668 = vmax.f32 %v2648, 0.0
    %v2669 = vmax.f32 %v2651, 0.0
    %v2670 = vmax.f32 %v2656, 0.0
    %v2671 = vmax.f32 %v2659, 0.0
    %v2672 = vpack.c.bf16 %v2662, %v2662
    %v2673 = vpack.c.bf16 %v2663, %v2663
    %v2674 = vpack.c.bf16 %v2664, %v2664
    %v2675 = vpack.c.bf16 %v2665, %v2665
    %v2676 = vpack.c.bf16 %v2666, %v2666
    %v2677 = vpack.c.bf16 %v2667, %v2667
    %v2678 = vpack.c.bf16 %v2668, %v2668
    %v2679 = vpack.c.bf16 %v2669, %v2669
    %v2680 = vpack.c.bf16 %v2670, %v2670
    %v2681 = vpack.c.bf16 %v2671, %v2671
    %v2683 = vsel %vm1076, %v2672, 4286644096
    %v2686 = vsel %vm1076, %v2673, 4286644096
    %v2689 = vsel %vm1076, %v2674, 4286644096
    %v2692 = vsel %vm1076, %v2675, 4286644096
    %v2695 = vsel %vm1076, %v2676, 4286644096
    %v2697 = vmax.bf16 %v2683, %v2695
    %v2699 = vsel %vm1076, %v2677, 4286644096
    %v2701 = vmax.bf16 %v2686, %v2699
    %v2703 = vsel %vm1076, %v2678, 4286644096
    %v2705 = vmax.bf16 %v2689, %v2703
    %v2707 = vsel %vm1076, %v2679, 4286644096
    %v2709 = vmax.bf16 %v2692, %v2707
    %v2711 = vsel %vm1076, %v2680, 4286644096
    %v2713 = vmax.bf16 %v2697, %v2711
    %v2715 = vsel %vm1076, %v2681, 4286644096
    %v2717 = vmax.bf16 %v2701, %v2715
    %v2718 = vmax.bf16 %v2713, %v2717
    %v2719 = vmax.bf16 %v2705, %v2709
    %v2720 = vmax.bf16 %v2718, %v2719
    %s2721 = scalar_lea.vmem [#allocation8], 128
    %v2722 = vld [vmem:[%s2721] sm:$0xf]
    %v2723 = vld [vmem:[%s2721 + $0x4] sm:$0xf]
    %v2724 = vld [vmem:[%s2721 + $0x8] sm:$0xf]
    %v2725 = vld [vmem:[%s2721 + $0xc] sm:$0xf]
    %v2726 = vld [vmem:[%s2721 + $0x10] sm:$0xf]
    %v2727 = vld [vmem:[%s2721 + $0x14] sm:$0xf]
    %v2728 = vld [vmem:[%s2721 + $0x18] sm:$0xf]
    %v2729 = vld [vmem:[%s2721 + $0x1c] sm:$0xf]
    %v2730 = vld [vmem:[%s2721 + $0x20] sm:$0xf]
    %v2731 = vld [vmem:[%s2721 + $0x24] sm:$0xf]
    %v2732 = vld [vmem:[%s2721 + $0x28] sm:$0xf]
    %v2733 = vld [vmem:[%s2721 + $0x2c] sm:$0xf]
    %v2734 = vld [vmem:[%s2721 + $0x30] sm:$0xf]
    %v2735 = vld [vmem:[%s2721 + $0x34] sm:$0xf]
    %v2736 = vld [vmem:[%s2721 + $0x38] sm:$0xf]
    %v2737 = vld [vmem:[%s2721 + $0x3c] sm:$0xf]
    %v2754 = vunpack.c.l.b16 %v2722
    %v2755 = vunpack.c.l.b16 %v2723
    %v2756 = vunpack.c.l.b16 %v2724
    %v2757 = vunpack.c.l.b16 %v2725
    %v2758 = vunpack.c.l.b16 %v2726
    %v2759 = vunpack.c.l.b16 %v2727
    %v2760 = vunpack.c.l.b16 %v2728
    %v2761 = vunpack.c.l.b16 %v2729
    %v2762 = vunpack.c.l.b16 %v2730
    %v2763 = vunpack.c.l.b16 %v2731
    %v2764 = vunpack.c.l.b16 %v2732
    %v2765 = vunpack.c.l.b16 %v2733
    %v2766 = vunpack.c.l.b16 %v2734
    %v2767 = vunpack.c.l.b16 %v2735
    %v2768 = vunpack.c.l.b16 %v2736
    %v2769 = vunpack.c.l.b16 %v2737
    %v2770 = vpack.c.b16 %v2755, %v2754
    %v2771 = vpack.c.b16 %v2757, %v2756
    %v2772 = vpack.c.b16 %v2759, %v2758
    %v2773 = vpack.c.b16 %v2761, %v2760
    %v2774 = vpack.c.b16 %v2763, %v2762
    %v2775 = vpack.c.b16 %v2765, %v2764
    %v2776 = vpack.c.b16 %v2767, %v2766
    %v2777 = vpack.c.b16 %v2769, %v2768
    %2786 = vmatprep.subr.bf16.mxu0 0
    %2787 = vmatpush1.bf16.msra.mxu0 %v2770
    %2788 = vmatprep.subr.bf16.mxu0 0
    %2789 = vmatpush1.bf16.msra.mxu0 %v2771
    %2790 = vmatprep.subr.bf16.mxu0 0
    %2791 = vmatpush1.bf16.msra.mxu0 %v2772
    %2792 = vmatprep.subr.bf16.mxu0 0
    %2793 = vmatpush1.bf16.msra.mxu0 %v2773
    %2794 = vmatprep.subr.bf16.mxu0 0
    %2795 = vmatpush1.bf16.msra.mxu0 %v2774
    %2796 = vmatprep.subr.bf16.mxu0 0
    %2797 = vmatpush1.bf16.msra.mxu0 %v2775
    %2798 = vmatprep.subr.bf16.mxu0 0
    %2799 = vmatpush1.bf16.msra.mxu0 %v2776
    %2800 = vmatprep.subr.bf16.mxu0 0
    %2801 = vmatpush1.bf16.msra.mxu0 %v2777
    %2802 = vmatprep.subr.bf16.mxu0 0
    %2803 = vmatpush1.bf16.msra.mxu0 0
    %2804 = vmatprep.subr.bf16.mxu0 0
    %2805 = vmatpush1.bf16.msra.mxu0 0
    %2806 = vmatprep.subr.bf16.mxu0 0
    %2807 = vmatpush1.bf16.msra.mxu0 0
    %2808 = vmatprep.subr.bf16.mxu0 0
    %2809 = vmatpush1.bf16.msra.mxu0 0
    %2810 = vmatprep.subr.bf16.mxu0 0
    %2811 = vmatpush1.bf16.msra.mxu0 0
    %2812 = vmatprep.subr.bf16.mxu0 0
    %2813 = vmatpush1.bf16.msra.mxu0 0
    %2814 = vmatprep.subr.bf16.mxu0 0
    %2815 = vmatpush1.bf16.msra.mxu0 0
    %2816 = vmatprep.subr.bf16.mxu0 0
    %2817 = vmatpush1.bf16.msra.mxu0 0
    %2818 = vmatprep.mubr.bf16.mxu0 0
    %2819 = vmatmul.mubr.bf16.gmra.mrb[0].mxu0 %v2720
    %v2820 = vpop.f32.mrb[0].mxu0
    %v2821 = vadd.f32 0.0, %v2820
    %v2822 = vpop.f32.mrb[0].mxu0
    %v2823 = vpop.f32.mrb[0].mxu0
    %v2824 = vpop.f32.mrb[0].mxu0
    %2825 = vdwg.mxu0
    %v2826 = vadd.f32 %v1823, %v2821
    %v2827 = vld [vmem:[%s6] sm:$0x1]
    %v2829 = vlaneseq
    %v2830 = vshrl.u32 %v2829, 7
    %v2831 = vsub.s32 0, %v2830
    %v2832 = vrot.slane %v2827, %v2831
    %v2834 = vadd.f32 %v2826, %v2832
    %2835 = vst [vmem:[#allocation10] sm:$0xff] %v2834
    // Predicated region
    $region46: #{tpu_custom_call.1} parent=1 // pred_check
      _
    $region47: #{tpu_custom_call.1} parent=1 // pred_check_branch
      %2837 = sbr.rel (0) target = $region49
    $region48: #{tpu_custom_call.1} parent=1 // pred_region
      %s2839 = ssub.s32 128, 128
      %2840 = vsyncadd [#allocation4], %s2839
      %s2842 = sshll.u32 [#allocation10], 4
      %s2843 = int_to_ptr.vmem [resolvable:$true] %s2842
      %2845 = dma.vmem_to_hbm [thread:$0]  %s2843, 128, %s7, [#allocation4]
    $region49: #{tpu_custom_call.1} parent=1 // pred_fallthru
      _
    // Predicated region
    $region50: #{tpu_custom_call.1} parent=1 // pred_check
      _
    $region51: #{tpu_custom_call.1} parent=1 // pred_check_branch
      %2847 = sbr.rel (0) target = $region53
    $region52: #{tpu_custom_call.1} parent=1 // pred_region
      %2848 = dma.done [#allocation4], 128
    $region53: #{tpu_custom_call.1} parent=1 // pred_fallthru
      _
    %2849 = vsyncpa [#allocation3], 1
    %2850 = vsyncpa [#allocation6], 1
    %2851 = vsyncpa [#allocation9], 1
    %2852 = vsyncpa [#allocation4], 1

</llo_original>
